<compile_context>
chip_gen: v5e
topology: v5e:2x2
jax: 0.10.0
libtpu: 0.0.40
codegen_flags: <defaults>
</compile_context>

<pallas_src>
import jax
import jax.numpy as jnp
from jax.experimental import pallas as pl
from jax.experimental.pallas import tpu as pltpu

# Original per-layer sizes / activations (encoder then decoder), PyTorch semantics:
# y = x @ W^T + b ; weights are stored transposed as (in_features, out_features).
LAYER_DIMS = [(784, 128), (128, 64), (64, 12), (12, 3),
              (3, 12), (12, 64), (64, 128), (128, 784)]
ACTIVATIONS = ["relu", "relu", "relu", None,
               "relu", "relu", "relu", "sigmoid"]

# Kernel-side schedule after fusing the activation-free (12->3)(3->12) pair into 12->12.
KERNEL_DIMS = [(784, 128), (128, 64), (64, 12), (12, 12),
               (12, 64), (64, 128), (128, 784)]
KERNEL_ACTS = ["relu", "relu", "relu", "relu", "relu", "relu", "sigmoid"]

FEATURES = 784


def _round_up(n, m):
    return ((n + m - 1) // m) * m


def _cdiv(a, b):
    return -(-a // b)


def _ae_kernel(*refs):
    """refs = (x_ref, w1, b1, ..., w7, b7, o_ref).

    Weights bf16 (MXU-native), biases f32; bias add / activations stay f32.
    """
    x_ref = refs[0]
    o_ref = refs[-1]
    params = refs[1:-1]

    h = x_ref[...]                                    # (TB, 784) f32
    for i, act in enumerate(KERNEL_ACTS):
        w = params[2 * i][...]                        # bf16 (in, out)
        b = params[2 * i + 1][...]                    # f32  (1, out)
        z = jnp.dot(h.astype(jnp.bfloat16), w,
                    preferred_element_type=jnp.float32) + b
        if act == "relu":
            h = jnp.maximum(z, 0.0)
        elif act == "sigmoid":
            # sigmoid(z) = 1 / (1 + exp(-z)); exp + approx reciprocal both hit the EUP.
            h = pl.reciprocal(1.0 + jnp.exp(-z), approx=True)
        else:
            h = z
    o_ref[...] = h.astype(o_ref.dtype)


def prepare_params(params):
    """One-time parameter prep, hoisted out of the per-call forward path.

    Fuses layer 4 (12->3, no activation) with layer 5 (3->12):
        z = h @ (W4 W5) + (b4 W5 + b5)   (exact in f32; latent is not a module output)
    and pre-casts weights to bf16 (halves resident param bytes); biases stay f32.
    Returns a flat tuple (w1, b1, ..., w7, b7).
    """
    (w4, b4), (w5, b5) = params[3], params[4]
    w45 = w4 @ w5                       # (12, 12)
    b45 = b4 @ w5 + b5                  # (1, 12)
    fused = list(params[:3]) + [(w45, b45)] + list(params[5:])   # 7 layers
    flat = []
    for w, b in fused:
        flat.append(jnp.asarray(w, jnp.bfloat16))
        flat.append(jnp.asarray(b, jnp.float32))
    return tuple(flat)


def _choose_tile(B, tb_max=512):
    """Batch tile: <= tb_max rows, multiple of 8 sublanes, minimal pad waste,
    and >=2 grid steps when B >= 16 so v7x megacore gets both TensorCores."""
    n_steps = max(1, _cdiv(B, tb_max))
    if B >= 16:
        n_steps = max(n_steps, 2)
    return _round_up(_cdiv(B, n_steps), 8)


def linear_autoencoder(x, flat_params):
    """x: (B, 784) float32; flat_params: output of prepare_params()."""
    B, F = x.shape
    assert F == FEATURES and len(flat_params) == 2 * len(KERNEL_DIMS)

    TB = _choose_tile(B)
    B_pad = _round_up(B, TB)
    needs_pad = B_pad != B
    if needs_pad:
        # Row-only padding; the common (divisible) path adds no extra HBM pass.
        x = jnp.zeros((B_pad, F), x.dtype).at[:B].set(x)

    grid = (B_pad // TB,)
    in_specs = [pl.BlockSpec((TB, F), lambda i: (i, 0))]
    for p in flat_params:
        # Full-array block, constant index_map -> DMA'd once, stays VMEM-resident.
        in_specs.append(pl.BlockSpec(p.shape, lambda i: (0, 0)))
    out_spec = pl.BlockSpec((TB, F), lambda i: (i, 0))

    flops = 2 * B_pad * sum(fi * fo for fi, fo in KERNEL_DIMS)
    param_bytes = sum(int(p.size) * p.dtype.itemsize for p in flat_params)
    bytes_accessed = 2 * B_pad * F * 4 + param_bytes    # x + out (f32) + params

    out = pl.pallas_call(
        _ae_kernel,
        out_shape=jax.ShapeDtypeStruct((B_pad, F), jnp.float32),
        grid=grid,
        in_specs=in_specs,
        out_specs=out_spec,
        compiler_params=pltpu.CompilerParams(
            dimension_semantics=("parallel",),       # megacore shard on batch axis
            vmem_limit_bytes=48 * 1024 * 1024,       # TB<=512 fits with headroom on v7x 64 MiB
        ),
        cost_estimate=pl.CostEstimate(
            flops=flops,
            transcendentals=B_pad * F,               # one exp per output element
            bytes_accessed=bytes_accessed,
        ),
    )(x, *flat_params)

    return out[:B] if needs_pad else out


def init_params(key):
    """Deterministic parameter init (same shapes as the PyTorch module)."""
    params = []
    for (fan_in, fan_out) in LAYER_DIMS:
        key, kw, kb = jax.random.split(key, 3)
        bound = 1.0 / jnp.sqrt(fan_in)
        w = jax.random.uniform(kw, (fan_in, fan_out), jnp.float32, -bound, bound)
        b = jax.random.uniform(kb, (1, fan_out), jnp.float32, -bound, bound)
        params.append((w, b))
    return params


def reference_forward(x, params):
    """Plain-JAX f32 reference of the original (unfused) forward pass."""
    h = x
    for (w, b), act in zip(params, ACTIVATIONS):
        z = h @ w + b
        if act == "relu":
            h = jnp.maximum(z, 0.0)
        elif act == "sigmoid":
            h = jax.nn.sigmoid(z)
        else:
            h = z
    return h


if __name__ == "__main__":
    key = jax.random.PRNGKey(0)
    key, kx = jax.random.split(key)

    B = 32  # small example batch
    x = jax.random.normal(kx, (B, 28 * 28), dtype=jnp.float32)

    params = init_params(key)
    flat_params = prepare_params(params)   # one-time prep, outside the forward path

    out = linear_autoencoder(x, flat_params)
    out = jax.block_until_ready(out)

    ref = reference_forward(x, params)
    assert out.shape == (B, 28 * 28)
    # bf16 MXU operands + approx reciprocal => looser tolerance than pure-f32 path.
    assert jnp.allclose(out, ref, atol=3e-2, rtol=3e-2), (
        "mismatch vs reference, max abs err = %e" % float(jnp.max(jnp.abs(out - ref))))

    print("KERNEL_OK")
</pallas_src>

<mosaic_0001>
module attributes {stable_mosaic.version = 11 : i64} {
  func.func @_ae_kernel(%arg0: i32, %arg1: memref<16x784xf32, #tpu.memory_space<vmem>>, %arg2: memref<784x128xbf16, #tpu.memory_space<vmem>>, %arg3: memref<1x128xf32, #tpu.memory_space<vmem>>, %arg4: memref<128x64xbf16, #tpu.memory_space<vmem>>, %arg5: memref<1x64xf32, #tpu.memory_space<vmem>>, %arg6: memref<64x12xbf16, #tpu.memory_space<vmem>>, %arg7: memref<1x12xf32, #tpu.memory_space<vmem>>, %arg8: memref<12x12xbf16, #tpu.memory_space<vmem>>, %arg9: memref<1x12xf32, #tpu.memory_space<vmem>>, %arg10: memref<12x64xbf16, #tpu.memory_space<vmem>>, %arg11: memref<1x64xf32, #tpu.memory_space<vmem>>, %arg12: memref<64x128xbf16, #tpu.memory_space<vmem>>, %arg13: memref<1x128xf32, #tpu.memory_space<vmem>>, %arg14: memref<128x784xbf16, #tpu.memory_space<vmem>>, %arg15: memref<1x784xf32, #tpu.memory_space<vmem>>, %arg16: memref<16x784xf32, #tpu.memory_space<vmem>>) attributes {dimension_semantics = [#tpu.dimension_semantics<parallel>], iteration_bounds = array<i64: 2>, scalar_prefetch = 0 : i64, scratch_operands = 0 : i64, tpu.core_type = #tpu.core_type<tc>, window_params = [{transform_indices = @transform_0, window_bounds = array<i64: 16, 784>}, {pipeline_mode = #tpu.pipeline_mode<synchronous>, transform_indices = @transform_1, window_bounds = array<i64: 784, 128>}, {pipeline_mode = #tpu.pipeline_mode<synchronous>, transform_indices = @transform_2, window_bounds = array<i64: 1, 128>}, {pipeline_mode = #tpu.pipeline_mode<synchronous>, transform_indices = @transform_3, window_bounds = array<i64: 128, 64>}, {pipeline_mode = #tpu.pipeline_mode<synchronous>, transform_indices = @transform_4, window_bounds = array<i64: 1, 64>}, {pipeline_mode = #tpu.pipeline_mode<synchronous>, transform_indices = @transform_5, window_bounds = array<i64: 64, 12>}, {pipeline_mode = #tpu.pipeline_mode<synchronous>, transform_indices = @transform_6, window_bounds = array<i64: 1, 12>}, {pipeline_mode = #tpu.pipeline_mode<synchronous>, transform_indices = @transform_7, window_bounds = array<i64: 12, 12>}, {pipeline_mode = #tpu.pipeline_mode<synchronous>, transform_indices = @transform_8, window_bounds = array<i64: 1, 12>}, {pipeline_mode = #tpu.pipeline_mode<synchronous>, transform_indices = @transform_9, window_bounds = array<i64: 12, 64>}, {pipeline_mode = #tpu.pipeline_mode<synchronous>, transform_indices = @transform_10, window_bounds = array<i64: 1, 64>}, {pipeline_mode = #tpu.pipeline_mode<synchronous>, transform_indices = @transform_11, window_bounds = array<i64: 64, 128>}, {pipeline_mode = #tpu.pipeline_mode<synchronous>, transform_indices = @transform_12, window_bounds = array<i64: 1, 128>}, {pipeline_mode = #tpu.pipeline_mode<synchronous>, transform_indices = @transform_13, window_bounds = array<i64: 128, 784>}, {pipeline_mode = #tpu.pipeline_mode<synchronous>, transform_indices = @transform_14, window_bounds = array<i64: 1, 784>}, {transform_indices = @transform_15, window_bounds = array<i64: 16, 784>}]} {
    %c0 = arith.constant 0 : index
    %c0_0 = arith.constant 0 : index
    %0 = vector.load %arg1[%c0, %c0_0] : memref<16x784xf32, #tpu.memory_space<vmem>>, vector<16x784xf32>
    %c0_1 = arith.constant 0 : index
    %c0_2 = arith.constant 0 : index
    %1 = vector.load %arg2[%c0_1, %c0_2] : memref<784x128xbf16, #tpu.memory_space<vmem>>, vector<784x128xbf16>
    %c0_3 = arith.constant 0 : index
    %c0_4 = arith.constant 0 : index
    %2 = vector.load %arg3[%c0_3, %c0_4] : memref<1x128xf32, #tpu.memory_space<vmem>>, vector<1x128xf32>
    %3 = arith.truncf %0 : vector<16x784xf32> to vector<16x784xbf16>
    %cst = arith.constant dense<0.000000e+00> : vector<16x128xf32>
    %4 = tpu.matmul %3, %1, %cst {dimension_numbers = #tpu.dot_dimension_numbers<[1], [0], [0], [1], [0, 0, 1, 1], [], []>} : vector<16x784xbf16>, vector<784x128xbf16>, vector<16x128xf32> -> vector<16x128xf32>
    %5 = vector.broadcast %2 : vector<1x128xf32> to vector<16x128xf32>
    %6 = arith.addf %4, %5 : vector<16x128xf32>
    %cst_5 = arith.constant 0.000000e+00 : f32
    %7 = vector.broadcast %cst_5 : f32 to vector<16x128xf32>
    %8 = arith.maximumf %6, %7 : vector<16x128xf32>
    %c0_6 = arith.constant 0 : index
    %c0_7 = arith.constant 0 : index
    %9 = vector.load %arg4[%c0_6, %c0_7] : memref<128x64xbf16, #tpu.memory_space<vmem>>, vector<128x64xbf16>
    %c0_8 = arith.constant 0 : index
    %c0_9 = arith.constant 0 : index
    %10 = vector.load %arg5[%c0_8, %c0_9] : memref<1x64xf32, #tpu.memory_space<vmem>>, vector<1x64xf32>
    %11 = arith.truncf %8 : vector<16x128xf32> to vector<16x128xbf16>
    %cst_10 = arith.constant dense<0.000000e+00> : vector<16x64xf32>
    %12 = tpu.matmul %11, %9, %cst_10 {dimension_numbers = #tpu.dot_dimension_numbers<[1], [0], [0], [1], [0, 0, 1, 1], [], []>} : vector<16x128xbf16>, vector<128x64xbf16>, vector<16x64xf32> -> vector<16x64xf32>
    %13 = vector.broadcast %10 : vector<1x64xf32> to vector<16x64xf32>
    %14 = arith.addf %12, %13 : vector<16x64xf32>
    %cst_11 = arith.constant 0.000000e+00 : f32
    %15 = vector.broadcast %cst_11 : f32 to vector<16x64xf32>
    %16 = arith.maximumf %14, %15 : vector<16x64xf32>
    %c0_12 = arith.constant 0 : index
    %c0_13 = arith.constant 0 : index
    %17 = vector.load %arg6[%c0_12, %c0_13] : memref<64x12xbf16, #tpu.memory_space<vmem>>, vector<64x12xbf16>
    %c0_14 = arith.constant 0 : index
    %c0_15 = arith.constant 0 : index
    %18 = vector.load %arg7[%c0_14, %c0_15] : memref<1x12xf32, #tpu.memory_space<vmem>>, vector<1x12xf32>
    %19 = arith.truncf %16 : vector<16x64xf32> to vector<16x64xbf16>
    %cst_16 = arith.constant dense<0.000000e+00> : vector<16x12xf32>
    %20 = tpu.matmul %19, %17, %cst_16 {dimension_numbers = #tpu.dot_dimension_numbers<[1], [0], [0], [1], [0, 0, 1, 1], [], []>} : vector<16x64xbf16>, vector<64x12xbf16>, vector<16x12xf32> -> vector<16x12xf32>
    %21 = vector.broadcast %18 : vector<1x12xf32> to vector<16x12xf32>
    %22 = arith.addf %20, %21 : vector<16x12xf32>
    %cst_17 = arith.constant 0.000000e+00 : f32
    %23 = vector.broadcast %cst_17 : f32 to vector<16x12xf32>
    %24 = arith.maximumf %22, %23 : vector<16x12xf32>
    %c0_18 = arith.constant 0 : index
    %c0_19 = arith.constant 0 : index
    %25 = vector.load %arg8[%c0_18, %c0_19] : memref<12x12xbf16, #tpu.memory_space<vmem>>, vector<12x12xbf16>
    %c0_20 = arith.constant 0 : index
    %c0_21 = arith.constant 0 : index
    %26 = vector.load %arg9[%c0_20, %c0_21] : memref<1x12xf32, #tpu.memory_space<vmem>>, vector<1x12xf32>
    %27 = arith.truncf %24 : vector<16x12xf32> to vector<16x12xbf16>
    %cst_22 = arith.constant dense<0.000000e+00> : vector<16x12xf32>
    %28 = tpu.matmul %27, %25, %cst_22 {dimension_numbers = #tpu.dot_dimension_numbers<[1], [0], [0], [1], [0, 0, 1, 1], [], []>} : vector<16x12xbf16>, vector<12x12xbf16>, vector<16x12xf32> -> vector<16x12xf32>
    %29 = vector.broadcast %26 : vector<1x12xf32> to vector<16x12xf32>
    %30 = arith.addf %28, %29 : vector<16x12xf32>
    %cst_23 = arith.constant 0.000000e+00 : f32
    %31 = vector.broadcast %cst_23 : f32 to vector<16x12xf32>
    %32 = arith.maximumf %30, %31 : vector<16x12xf32>
    %c0_24 = arith.constant 0 : index
    %c0_25 = arith.constant 0 : index
    %33 = vector.load %arg10[%c0_24, %c0_25] : memref<12x64xbf16, #tpu.memory_space<vmem>>, vector<12x64xbf16>
    %c0_26 = arith.constant 0 : index
    %c0_27 = arith.constant 0 : index
    %34 = vector.load %arg11[%c0_26, %c0_27] : memref<1x64xf32, #tpu.memory_space<vmem>>, vector<1x64xf32>
    %35 = arith.truncf %32 : vector<16x12xf32> to vector<16x12xbf16>
    %cst_28 = arith.constant dense<0.000000e+00> : vector<16x64xf32>
    %36 = tpu.matmul %35, %33, %cst_28 {dimension_numbers = #tpu.dot_dimension_numbers<[1], [0], [0], [1], [0, 0, 1, 1], [], []>} : vector<16x12xbf16>, vector<12x64xbf16>, vector<16x64xf32> -> vector<16x64xf32>
    %37 = vector.broadcast %34 : vector<1x64xf32> to vector<16x64xf32>
    %38 = arith.addf %36, %37 : vector<16x64xf32>
    %cst_29 = arith.constant 0.000000e+00 : f32
    %39 = vector.broadcast %cst_29 : f32 to vector<16x64xf32>
    %40 = arith.maximumf %38, %39 : vector<16x64xf32>
    %c0_30 = arith.constant 0 : index
    %c0_31 = arith.constant 0 : index
    %41 = vector.load %arg12[%c0_30, %c0_31] : memref<64x128xbf16, #tpu.memory_space<vmem>>, vector<64x128xbf16>
    %c0_32 = arith.constant 0 : index
    %c0_33 = arith.constant 0 : index
    %42 = vector.load %arg13[%c0_32, %c0_33] : memref<1x128xf32, #tpu.memory_space<vmem>>, vector<1x128xf32>
    %43 = arith.truncf %40 : vector<16x64xf32> to vector<16x64xbf16>
    %cst_34 = arith.constant dense<0.000000e+00> : vector<16x128xf32>
    %44 = tpu.matmul %43, %41, %cst_34 {dimension_numbers = #tpu.dot_dimension_numbers<[1], [0], [0], [1], [0, 0, 1, 1], [], []>} : vector<16x64xbf16>, vector<64x128xbf16>, vector<16x128xf32> -> vector<16x128xf32>
    %45 = vector.broadcast %42 : vector<1x128xf32> to vector<16x128xf32>
    %46 = arith.addf %44, %45 : vector<16x128xf32>
    %cst_35 = arith.constant 0.000000e+00 : f32
    %47 = vector.broadcast %cst_35 : f32 to vector<16x128xf32>
    %48 = arith.maximumf %46, %47 : vector<16x128xf32>
    %c0_36 = arith.constant 0 : index
    %c0_37 = arith.constant 0 : index
    %49 = vector.load %arg14[%c0_36, %c0_37] : memref<128x784xbf16, #tpu.memory_space<vmem>>, vector<128x784xbf16>
    %c0_38 = arith.constant 0 : index
    %c0_39 = arith.constant 0 : index
    %50 = vector.load %arg15[%c0_38, %c0_39] : memref<1x784xf32, #tpu.memory_space<vmem>>, vector<1x784xf32>
    %51 = arith.truncf %48 : vector<16x128xf32> to vector<16x128xbf16>
    %cst_40 = arith.constant dense<0.000000e+00> : vector<16x784xf32>
    %52 = tpu.matmul %51, %49, %cst_40 {dimension_numbers = #tpu.dot_dimension_numbers<[1], [0], [0], [1], [0, 0, 1, 1], [], []>} : vector<16x128xbf16>, vector<128x784xbf16>, vector<16x784xf32> -> vector<16x784xf32>
    %53 = vector.broadcast %50 : vector<1x784xf32> to vector<16x784xf32>
    %54 = arith.addf %52, %53 : vector<16x784xf32>
    %cst_41 = arith.constant 0.000000e+00 : f32
    %55 = vector.broadcast %cst_41 : f32 to vector<16x784xf32>
    %56 = arith.subf %55, %54 : vector<16x784xf32>
    %57 = math.exp %56 : vector<16x784xf32>
    %cst_42 = arith.constant 1.000000e+00 : f32
    %58 = vector.broadcast %cst_42 : f32 to vector<16x784xf32>
    %59 = arith.addf %58, %57 : vector<16x784xf32>
    %60 = tpu.reciprocal %59 {approx = true} : vector<16x784xf32> -> vector<16x784xf32>
    %c0_43 = arith.constant 0 : index
    %c0_44 = arith.constant 0 : index
    %61 = vector.load %arg16[%c0_43, %c0_44] : memref<16x784xf32, #tpu.memory_space<vmem>>, vector<16x784xf32>
    tpu.vector_store %arg16[%c0_43, %c0_44], %60 {strides = array<i32>} : memref<16x784xf32, #tpu.memory_space<vmem>>, vector<16x784xf32>,
    return
  }
  func.func @transform_0(%arg0: i32) -> (i32, i32) {
    %c0_i32 = arith.constant 0 : i32
    %c0_i32_0 = arith.constant 0 : i32
    return %arg0, %c0_i32 : i32, i32
  }
  func.func @transform_1(%arg0: i32) -> (i32, i32) {
    %c0_i32 = arith.constant 0 : i32
    %c0_i32_0 = arith.constant 0 : i32
    %c0_i32_1 = arith.constant 0 : i32
    return %c0_i32, %c0_i32_0 : i32, i32
  }
  func.func @transform_2(%arg0: i32) -> (i32, i32) {
    %c0_i32 = arith.constant 0 : i32
    %c0_i32_0 = arith.constant 0 : i32
    %c0_i32_1 = arith.constant 0 : i32
    return %c0_i32, %c0_i32_0 : i32, i32
  }
  func.func @transform_3(%arg0: i32) -> (i32, i32) {
    %c0_i32 = arith.constant 0 : i32
    %c0_i32_0 = arith.constant 0 : i32
    %c0_i32_1 = arith.constant 0 : i32
    return %c0_i32, %c0_i32_0 : i32, i32
  }
  func.func @transform_4(%arg0: i32) -> (i32, i32) {
    %c0_i32 = arith.constant 0 : i32
    %c0_i32_0 = arith.constant 0 : i32
    %c0_i32_1 = arith.constant 0 : i32
    return %c0_i32, %c0_i32_0 : i32, i32
  }
  func.func @transform_5(%arg0: i32) -> (i32, i32) {
    %c0_i32 = arith.constant 0 : i32
    %c0_i32_0 = arith.constant 0 : i32
    %c0_i32_1 = arith.constant 0 : i32
    return %c0_i32, %c0_i32_0 : i32, i32
  }
  func.func @transform_6(%arg0: i32) -> (i32, i32) {
    %c0_i32 = arith.constant 0 : i32
    %c0_i32_0 = arith.constant 0 : i32
    %c0_i32_1 = arith.constant 0 : i32
    return %c0_i32, %c0_i32_0 : i32, i32
  }
  func.func @transform_7(%arg0: i32) -> (i32, i32) {
    %c0_i32 = arith.constant 0 : i32
    %c0_i32_0 = arith.constant 0 : i32
    %c0_i32_1 = arith.constant 0 : i32
    return %c0_i32, %c0_i32_0 : i32, i32
  }
  func.func @transform_8(%arg0: i32) -> (i32, i32) {
    %c0_i32 = arith.constant 0 : i32
    %c0_i32_0 = arith.constant 0 : i32
    %c0_i32_1 = arith.constant 0 : i32
    return %c0_i32, %c0_i32_0 : i32, i32
  }
  func.func @transform_9(%arg0: i32) -> (i32, i32) {
    %c0_i32 = arith.constant 0 : i32
    %c0_i32_0 = arith.constant 0 : i32
    %c0_i32_1 = arith.constant 0 : i32
    return %c0_i32, %c0_i32_0 : i32, i32
  }
  func.func @transform_10(%arg0: i32) -> (i32, i32) {
    %c0_i32 = arith.constant 0 : i32
    %c0_i32_0 = arith.constant 0 : i32
    %c0_i32_1 = arith.constant 0 : i32
    return %c0_i32, %c0_i32_0 : i32, i32
  }
  func.func @transform_11(%arg0: i32) -> (i32, i32) {
    %c0_i32 = arith.constant 0 : i32
    %c0_i32_0 = arith.constant 0 : i32
    %c0_i32_1 = arith.constant 0 : i32
    return %c0_i32, %c0_i32_0 : i32, i32
  }
  func.func @transform_12(%arg0: i32) -> (i32, i32) {
    %c0_i32 = arith.constant 0 : i32
    %c0_i32_0 = arith.constant 0 : i32
    %c0_i32_1 = arith.constant 0 : i32
    return %c0_i32, %c0_i32_0 : i32, i32
  }
  func.func @transform_13(%arg0: i32) -> (i32, i32) {
    %c0_i32 = arith.constant 0 : i32
    %c0_i32_0 = arith.constant 0 : i32
    %c0_i32_1 = arith.constant 0 : i32
    return %c0_i32, %c0_i32_0 : i32, i32
  }
  func.func @transform_14(%arg0: i32) -> (i32, i32) {
    %c0_i32 = arith.constant 0 : i32
    %c0_i32_0 = arith.constant 0 : i32
    %c0_i32_1 = arith.constant 0 : i32
    return %c0_i32, %c0_i32_0 : i32, i32
  }
  func.func @transform_15(%arg0: i32) -> (i32, i32) {
    %c0_i32 = arith.constant 0 : i32
    %c0_i32_0 = arith.constant 0 : i32
    return %arg0, %c0_i32 : i32, i32
  }
}

</mosaic_0001>

<llo_original>
// kernel: tpu_custom_call.1
$region0: #{tpu_custom_call.1}
  #allocation0 [shape = 'u32[]', space=smem, size = 0x4, offset = 0x4, fixed_abs, tag = 'smem constant byte address 0x4 - core index']
  #allocation1 [shape = 'u32[72,128]{1,0:T(1,128)}', space=vmem, size = 0x9000, scoped, tag = 'internal scratch']
  %s0 = inlined_call_operand.vmem [shape: f32[32,784], index: 0, kind: input, shape index: {}]
  %s1 = inlined_call_operand.vmem [shape: bf16[784,128], index: 1, kind: input, shape index: {}]
  %s2 = inlined_call_operand.vmem [shape: f32[1,128], index: 2, kind: input, shape index: {}]
  %s3 = inlined_call_operand.vmem [shape: bf16[128,64], index: 3, kind: input, shape index: {}]
  %s4 = inlined_call_operand.vmem [shape: f32[1,64], index: 4, kind: input, shape index: {}]
  %s5 = inlined_call_operand.vmem [shape: bf16[64,12], index: 5, kind: input, shape index: {}]
  %s6 = inlined_call_operand.vmem [shape: f32[1,12], index: 6, kind: input, shape index: {}]
  %s7 = inlined_call_operand.vmem [shape: bf16[12,12], index: 7, kind: input, shape index: {}]
  %s8 = inlined_call_operand.vmem [shape: f32[1,12], index: 8, kind: input, shape index: {}]
  %s9 = inlined_call_operand.vmem [shape: bf16[12,64], index: 9, kind: input, shape index: {}]
  %s10 = inlined_call_operand.vmem [shape: f32[1,64], index: 10, kind: input, shape index: {}]
  %s11 = inlined_call_operand.vmem [shape: bf16[64,128], index: 11, kind: input, shape index: {}]
  %s12 = inlined_call_operand.vmem [shape: f32[1,128], index: 12, kind: input, shape index: {}]
  %s13 = inlined_call_operand.vmem [shape: bf16[128,784], index: 13, kind: input, shape index: {}]
  %s14 = inlined_call_operand.vmem [shape: f32[1,784], index: 14, kind: input, shape index: {}]
  %s15 = inlined_call_operand.hbm [shape: f32[32,784], index: 15, kind: output, shape index: {}]
  %s16 = sld [smem:[#allocation0]]
  $region93: #{tpu_custom_call.1} parent=0
    _
  %s18 = ssub.s32 1, %s16
  %s19 = scalar_select 0, %s18, %s16
  $region1: #{tpu_custom_call.1} parent=0
    #allocation2 [shape = 'u8[114688]{0}', space=vmem, size = 0x1c000, scoped, tag = 'output window, operand 0']
    #allocation3 [shape = 's32[2]{0}', space=sflag, size = 0x8, scoped, tag = 'scoped memory for tpu_custom_call.1']
    %20 = vsyncpa [#allocation3], 0
    %s21 = scalar_lea.sflag [#allocation3], 1
    %22 = vsyncpa %s21, 0
    loop: start=0, step=1, limit=4
    $region2: #{tpu_custom_call.1} parent=1 // loop_pre_header
      _
    $region3: #{tpu_custom_call.1} parent=1 // loop_header
      %s24 = sphi 0, %s28
      %p25 = scmp.ge.s32.totalorder %s24, 4
      %s34 = sphi 0, %s36
      %s37 = sphi 0, %s34
      %s38 = sphi 0, %s37
      %s54 = sphi 0, %s38
      %s58 = sphi 0, %s58
      %s60 = sphi 0, %s58
      %s61 = sphi 0, %s60
      %s75 = sphi 0, %s61
      %s79 = sphi 0, %s79
      %s81 = sphi 0, %s79
      %s82 = sphi 0, %s81
      %s96 = sphi 0, %s82
      %s100 = sphi 0, %s100
      %s102 = sphi 0, %s100
      %s103 = sphi 0, %s102
      %s117 = sphi 0, %s103
      %s121 = sphi 0, %s121
      %s123 = sphi 0, %s121
      %s124 = sphi 0, %s123
      %s138 = sphi 0, %s124
      %s142 = sphi 0, %s142
      %s144 = sphi 0, %s142
      %s145 = sphi 0, %s144
      %s159 = sphi 0, %s145
      %s163 = sphi 0, %s163
      %s165 = sphi 0, %s163
      %s166 = sphi 0, %s165
      %s180 = sphi 0, %s166
      %s184 = sphi 0, %s184
      %s186 = sphi 0, %s184
      %s187 = sphi 0, %s186
      %s201 = sphi 0, %s187
      %s205 = sphi 0, %s205
      %s207 = sphi 0, %s205
      %s208 = sphi 0, %s207
      %s222 = sphi 0, %s208
      %s226 = sphi 0, %s226
      %s228 = sphi 0, %s226
      %s229 = sphi 0, %s228
      %s243 = sphi 0, %s229
      %s247 = sphi 0, %s247
      %s249 = sphi 0, %s247
      %s250 = sphi 0, %s249
      %s264 = sphi 0, %s250
      %s268 = sphi 0, %s268
      %s270 = sphi 0, %s268
      %s271 = sphi 0, %s270
      %s285 = sphi 0, %s271
      %s289 = sphi 0, %s289
      %s291 = sphi 0, %s289
      %s292 = sphi 0, %s291
      %s306 = sphi 0, %s292
      %s310 = sphi 0, %s310
      %s312 = sphi 0, %s310
      %s313 = sphi 0, %s312
      %s327 = sphi 0, %s313
      %s331 = sphi 0, %s331
      %s333 = sphi 0, %s331
      %s334 = sphi 0, %s333
      %s348 = sphi 0, %s334
      %s354 = sphi 0, %s356
      %s357 = sphi 0, %s354
      %s358 = sphi 0, %s357
      %s374 = sphi 0, %s358
    $region4: #{tpu_custom_call.1} parent=1 // loop_header_branch
      %27 = sbr.rel (%p25) target = $region8
    $region5: #{tpu_custom_call.1} parent=1 // loop_body
      %s29 = ssub.s32 %s24, 1
      %s30 = ssub.s32 %s24, 2
      %s31 = sadd.s32 %s24, 1
      %s32 = ssub.s32 %s24, %s31
      %p33 = scmp.eq.s32.totalorder %s32, 0
      %s35 = sadd.s32 %s34, 1
      %s36 = scalar_select %p33, %s34, %s35
      %p39 = pneg %p33
      %p40 = scmp.eq.s32.totalorder %s24, 1
      %p41 = por %p39, %p40
      %p42 = scmp.ne.s32.totalorder %s34, %s37
      %p43 = scmp.eq.s32.totalorder %s24, 0
      %p44 = por %p42, %p43
      %p45 = scmp.ne.s32.totalorder %s34, %s37
      %p46 = scmp.eq.s32.totalorder %s29, 1
      %p47 = por %p45, %p46
      %p48 = scmp.ne.s32.totalorder %s37, %s38
      %p49 = scmp.eq.s32.totalorder %s29, 0
      %p50 = por %p48, %p49
      %p51 = scmp.ne.s32.totalorder %s37, %s38
      %p52 = scmp.eq.s32.totalorder %s30, 1
      %p53 = por %p51, %p52
      %p55 = scmp.ne.s32.totalorder %s38, %s54
      %p56 = scmp.eq.s32.totalorder %s30, 0
      %p57 = por %p55, %p56
      %s59 = sadd.s32 %s58, 1
      %p62 = scmp.eq.s32.totalorder %s24, 1
      %p63 = scmp.ne.s32.totalorder %s58, %s60
      %p64 = scmp.eq.s32.totalorder %s24, 0
      %p65 = por %p63, %p64
      %p66 = scmp.ne.s32.totalorder %s58, %s60
      %p67 = scmp.eq.s32.totalorder %s29, 1
      %p68 = por %p66, %p67
      %p69 = scmp.ne.s32.totalorder %s60, %s61
      %p70 = scmp.eq.s32.totalorder %s29, 0
      %p71 = por %p69, %p70
      %p72 = scmp.ne.s32.totalorder %s60, %s61
      %p73 = scmp.eq.s32.totalorder %s30, 1
      %p74 = por %p72, %p73
      %p76 = scmp.ne.s32.totalorder %s61, %s75
      %p77 = scmp.eq.s32.totalorder %s30, 0
      %p78 = por %p76, %p77
      %s80 = sadd.s32 %s79, 1
      %p83 = scmp.eq.s32.totalorder %s24, 1
      %p84 = scmp.ne.s32.totalorder %s79, %s81
      %p85 = scmp.eq.s32.totalorder %s24, 0
      %p86 = por %p84, %p85
      %p87 = scmp.ne.s32.totalorder %s79, %s81
      %p88 = scmp.eq.s32.totalorder %s29, 1
      %p89 = por %p87, %p88
      %p90 = scmp.ne.s32.totalorder %s81, %s82
      %p91 = scmp.eq.s32.totalorder %s29, 0
      %p92 = por %p90, %p91
      %p93 = scmp.ne.s32.totalorder %s81, %s82
      %p94 = scmp.eq.s32.totalorder %s30, 1
      %p95 = por %p93, %p94
      %p97 = scmp.ne.s32.totalorder %s82, %s96
      %p98 = scmp.eq.s32.totalorder %s30, 0
      %p99 = por %p97, %p98
      %s101 = sadd.s32 %s100, 1
      %p104 = scmp.eq.s32.totalorder %s24, 1
      %p105 = scmp.ne.s32.totalorder %s100, %s102
      %p106 = scmp.eq.s32.totalorder %s24, 0
      %p107 = por %p105, %p106
      %p108 = scmp.ne.s32.totalorder %s100, %s102
      %p109 = scmp.eq.s32.totalorder %s29, 1
      %p110 = por %p108, %p109
      %p111 = scmp.ne.s32.totalorder %s102, %s103
      %p112 = scmp.eq.s32.totalorder %s29, 0
      %p113 = por %p111, %p112
      %p114 = scmp.ne.s32.totalorder %s102, %s103
      %p115 = scmp.eq.s32.totalorder %s30, 1
      %p116 = por %p114, %p115
      %p118 = scmp.ne.s32.totalorder %s103, %s117
      %p119 = scmp.eq.s32.totalorder %s30, 0
      %p120 = por %p118, %p119
      %s122 = sadd.s32 %s121, 1
      %p125 = scmp.eq.s32.totalorder %s24, 1
      %p126 = scmp.ne.s32.totalorder %s121, %s123
      %p127 = scmp.eq.s32.totalorder %s24, 0
      %p128 = por %p126, %p127
      %p129 = scmp.ne.s32.totalorder %s121, %s123
      %p130 = scmp.eq.s32.totalorder %s29, 1
      %p131 = por %p129, %p130
      %p132 = scmp.ne.s32.totalorder %s123, %s124
      %p133 = scmp.eq.s32.totalorder %s29, 0
      %p134 = por %p132, %p133
      %p135 = scmp.ne.s32.totalorder %s123, %s124
      %p136 = scmp.eq.s32.totalorder %s30, 1
      %p137 = por %p135, %p136
      %p139 = scmp.ne.s32.totalorder %s124, %s138
      %p140 = scmp.eq.s32.totalorder %s30, 0
      %p141 = por %p139, %p140
      %s143 = sadd.s32 %s142, 1
      %p146 = scmp.eq.s32.totalorder %s24, 1
      %p147 = scmp.ne.s32.totalorder %s142, %s144
      %p148 = scmp.eq.s32.totalorder %s24, 0
      %p149 = por %p147, %p148
      %p150 = scmp.ne.s32.totalorder %s142, %s144
      %p151 = scmp.eq.s32.totalorder %s29, 1
      %p152 = por %p150, %p151
      %p153 = scmp.ne.s32.totalorder %s144, %s145
      %p154 = scmp.eq.s32.totalorder %s29, 0
      %p155 = por %p153, %p154
      %p156 = scmp.ne.s32.totalorder %s144, %s145
      %p157 = scmp.eq.s32.totalorder %s30, 1
      %p158 = por %p156, %p157
      %p160 = scmp.ne.s32.totalorder %s145, %s159
      %p161 = scmp.eq.s32.totalorder %s30, 0
      %p162 = por %p160, %p161
      %s164 = sadd.s32 %s163, 1
      %p167 = scmp.eq.s32.totalorder %s24, 1
      %p168 = scmp.ne.s32.totalorder %s163, %s165
      %p169 = scmp.eq.s32.totalorder %s24, 0
      %p170 = por %p168, %p169
      %p171 = scmp.ne.s32.totalorder %s163, %s165
      %p172 = scmp.eq.s32.totalorder %s29, 1
      %p173 = por %p171, %p172
      %p174 = scmp.ne.s32.totalorder %s165, %s166
      %p175 = scmp.eq.s32.totalorder %s29, 0
      %p176 = por %p174, %p175
      %p177 = scmp.ne.s32.totalorder %s165, %s166
      %p178 = scmp.eq.s32.totalorder %s30, 1
      %p179 = por %p177, %p178
      %p181 = scmp.ne.s32.totalorder %s166, %s180
      %p182 = scmp.eq.s32.totalorder %s30, 0
      %p183 = por %p181, %p182
      %s185 = sadd.s32 %s184, 1
      %p188 = scmp.eq.s32.totalorder %s24, 1
      %p189 = scmp.ne.s32.totalorder %s184, %s186
      %p190 = scmp.eq.s32.totalorder %s24, 0
      %p191 = por %p189, %p190
      %p192 = scmp.ne.s32.totalorder %s184, %s186
      %p193 = scmp.eq.s32.totalorder %s29, 1
      %p194 = por %p192, %p193
      %p195 = scmp.ne.s32.totalorder %s186, %s187
      %p196 = scmp.eq.s32.totalorder %s29, 0
      %p197 = por %p195, %p196
      %p198 = scmp.ne.s32.totalorder %s186, %s187
      %p199 = scmp.eq.s32.totalorder %s30, 1
      %p200 = por %p198, %p199
      %p202 = scmp.ne.s32.totalorder %s187, %s201
      %p203 = scmp.eq.s32.totalorder %s30, 0
      %p204 = por %p202, %p203
      %s206 = sadd.s32 %s205, 1
      %p209 = scmp.eq.s32.totalorder %s24, 1
      %p210 = scmp.ne.s32.totalorder %s205, %s207
      %p211 = scmp.eq.s32.totalorder %s24, 0
      %p212 = por %p210, %p211
      %p213 = scmp.ne.s32.totalorder %s205, %s207
      %p214 = scmp.eq.s32.totalorder %s29, 1
      %p215 = por %p213, %p214
      %p216 = scmp.ne.s32.totalorder %s207, %s208
      %p217 = scmp.eq.s32.totalorder %s29, 0
      %p218 = por %p216, %p217
      %p219 = scmp.ne.s32.totalorder %s207, %s208
      %p220 = scmp.eq.s32.totalorder %s30, 1
      %p221 = por %p219, %p220
      %p223 = scmp.ne.s32.totalorder %s208, %s222
      %p224 = scmp.eq.s32.totalorder %s30, 0
      %p225 = por %p223, %p224
      %s227 = sadd.s32 %s226, 1
      %p230 = scmp.eq.s32.totalorder %s24, 1
      %p231 = scmp.ne.s32.totalorder %s226, %s228
      %p232 = scmp.eq.s32.totalorder %s24, 0
      %p233 = por %p231, %p232
      %p234 = scmp.ne.s32.totalorder %s226, %s228
      %p235 = scmp.eq.s32.totalorder %s29, 1
      %p236 = por %p234, %p235
      %p237 = scmp.ne.s32.totalorder %s228, %s229
      %p238 = scmp.eq.s32.totalorder %s29, 0
      %p239 = por %p237, %p238
      %p240 = scmp.ne.s32.totalorder %s228, %s229
      %p241 = scmp.eq.s32.totalorder %s30, 1
      %p242 = por %p240, %p241
      %p244 = scmp.ne.s32.totalorder %s229, %s243
      %p245 = scmp.eq.s32.totalorder %s30, 0
      %p246 = por %p244, %p245
      %s248 = sadd.s32 %s247, 1
      %p251 = scmp.eq.s32.totalorder %s24, 1
      %p252 = scmp.ne.s32.totalorder %s247, %s249
      %p253 = scmp.eq.s32.totalorder %s24, 0
      %p254 = por %p252, %p253
      %p255 = scmp.ne.s32.totalorder %s247, %s249
      %p256 = scmp.eq.s32.totalorder %s29, 1
      %p257 = por %p255, %p256
      %p258 = scmp.ne.s32.totalorder %s249, %s250
      %p259 = scmp.eq.s32.totalorder %s29, 0
      %p260 = por %p258, %p259
      %p261 = scmp.ne.s32.totalorder %s249, %s250
      %p262 = scmp.eq.s32.totalorder %s30, 1
      %p263 = por %p261, %p262
      %p265 = scmp.ne.s32.totalorder %s250, %s264
      %p266 = scmp.eq.s32.totalorder %s30, 0
      %p267 = por %p265, %p266
      %s269 = sadd.s32 %s268, 1
      %p272 = scmp.eq.s32.totalorder %s24, 1
      %p273 = scmp.ne.s32.totalorder %s268, %s270
      %p274 = scmp.eq.s32.totalorder %s24, 0
      %p275 = por %p273, %p274
      %p276 = scmp.ne.s32.totalorder %s268, %s270
      %p277 = scmp.eq.s32.totalorder %s29, 1
      %p278 = por %p276, %p277
      %p279 = scmp.ne.s32.totalorder %s270, %s271
      %p280 = scmp.eq.s32.totalorder %s29, 0
      %p281 = por %p279, %p280
      %p282 = scmp.ne.s32.totalorder %s270, %s271
      %p283 = scmp.eq.s32.totalorder %s30, 1
      %p284 = por %p282, %p283
      %p286 = scmp.ne.s32.totalorder %s271, %s285
      %p287 = scmp.eq.s32.totalorder %s30, 0
      %p288 = por %p286, %p287
      %s290 = sadd.s32 %s289, 1
      %p293 = scmp.eq.s32.totalorder %s24, 1
      %p294 = scmp.ne.s32.totalorder %s289, %s291
      %p295 = scmp.eq.s32.totalorder %s24, 0
      %p296 = por %p294, %p295
      %p297 = scmp.ne.s32.totalorder %s289, %s291
      %p298 = scmp.eq.s32.totalorder %s29, 1
      %p299 = por %p297, %p298
      %p300 = scmp.ne.s32.totalorder %s291, %s292
      %p301 = scmp.eq.s32.totalorder %s29, 0
      %p302 = por %p300, %p301
      %p303 = scmp.ne.s32.totalorder %s291, %s292
      %p304 = scmp.eq.s32.totalorder %s30, 1
      %p305 = por %p303, %p304
      %p307 = scmp.ne.s32.totalorder %s292, %s306
      %p308 = scmp.eq.s32.totalorder %s30, 0
      %p309 = por %p307, %p308
      %s311 = sadd.s32 %s310, 1
      %p314 = scmp.eq.s32.totalorder %s24, 1
      %p315 = scmp.ne.s32.totalorder %s310, %s312
      %p316 = scmp.eq.s32.totalorder %s24, 0
      %p317 = por %p315, %p316
      %p318 = scmp.ne.s32.totalorder %s310, %s312
      %p319 = scmp.eq.s32.totalorder %s29, 1
      %p320 = por %p318, %p319
      %p321 = scmp.ne.s32.totalorder %s312, %s313
      %p322 = scmp.eq.s32.totalorder %s29, 0
      %p323 = por %p321, %p322
      %p324 = scmp.ne.s32.totalorder %s312, %s313
      %p325 = scmp.eq.s32.totalorder %s30, 1
      %p326 = por %p324, %p325
      %p328 = scmp.ne.s32.totalorder %s313, %s327
      %p329 = scmp.eq.s32.totalorder %s30, 0
      %p330 = por %p328, %p329
      %s332 = sadd.s32 %s331, 1
      %p335 = scmp.eq.s32.totalorder %s24, 1
      %p336 = scmp.ne.s32.totalorder %s331, %s333
      %p337 = scmp.eq.s32.totalorder %s24, 0
      %p338 = por %p336, %p337
      %p339 = scmp.ne.s32.totalorder %s331, %s333
      %p340 = scmp.eq.s32.totalorder %s29, 1
      %p341 = por %p339, %p340
      %p342 = scmp.ne.s32.totalorder %s333, %s334
      %p343 = scmp.eq.s32.totalorder %s29, 0
      %p344 = por %p342, %p343
      %p345 = scmp.ne.s32.totalorder %s333, %s334
      %p346 = scmp.eq.s32.totalorder %s30, 1
      %p347 = por %p345, %p346
      %p349 = scmp.ne.s32.totalorder %s334, %s348
      %p350 = scmp.eq.s32.totalorder %s30, 0
      %p351 = por %p349, %p350
      %s352 = ssub.s32 %s24, %s31
      %p353 = scmp.eq.s32.totalorder %s352, 0
      %s355 = sadd.s32 %s354, 1
      %s356 = scalar_select %p353, %s354, %s355
      %p359 = pneg %p353
      %p360 = scmp.eq.s32.totalorder %s24, 1
      %p361 = por %p359, %p360
      %p362 = scmp.ne.s32.totalorder %s354, %s357
      %p363 = scmp.eq.s32.totalorder %s24, 0
      %p364 = por %p362, %p363
      %p365 = scmp.ne.s32.totalorder %s354, %s357
      %p366 = scmp.eq.s32.totalorder %s29, 1
      %p367 = por %p365, %p366
      %p368 = scmp.ne.s32.totalorder %s357, %s358
      %p369 = scmp.eq.s32.totalorder %s29, 0
      %p370 = por %p368, %p369
      %p371 = scmp.ne.s32.totalorder %s357, %s358
      %p372 = scmp.eq.s32.totalorder %s30, 1
      %p373 = por %p371, %p372
      %p375 = scmp.ne.s32.totalorder %s358, %s374
      %p376 = scmp.eq.s32.totalorder %s30, 0
      %p377 = por %p375, %p376
      %p378 = scmp.le.s32.totalorder 1, %s24
      %p379 = scmp.lt.s32.totalorder %s24, 3
      %p380 = pnand %p378, %p379
      %p381 = pneg %p380
      // Predicated region
      $region9: #{tpu_custom_call.1} parent=5 // pred_check
        _
      $region10: #{tpu_custom_call.1} parent=5 // pred_check_branch
        %383 = sbr.rel (%p380) target = $region12
      $region11: #{tpu_custom_call.1} parent=5 // pred_region
        %s384 = ssub.s32 %s24, 1
        // Predicated region
        $region13: #{tpu_custom_call.1} parent=11 // pred_check
          %p385 = pneg %p71
        $region14: #{tpu_custom_call.1} parent=11 // pred_check_branch
          %387 = sbr.rel (%p385) target = $region16
        $region15: #{tpu_custom_call.1} parent=11 // pred_region
          _
        $region16: #{tpu_custom_call.1} parent=11 // pred_fallthru
          _
        // Predicated region
        $region17: #{tpu_custom_call.1} parent=11 // pred_check
          %p388 = pneg %p92
        $region18: #{tpu_custom_call.1} parent=11 // pred_check_branch
          %390 = sbr.rel (%p388) target = $region20
        $region19: #{tpu_custom_call.1} parent=11 // pred_region
          _
        $region20: #{tpu_custom_call.1} parent=11 // pred_fallthru
          _
        // Predicated region
        $region21: #{tpu_custom_call.1} parent=11 // pred_check
          %p391 = pneg %p113
        $region22: #{tpu_custom_call.1} parent=11 // pred_check_branch
          %393 = sbr.rel (%p391) target = $region24
        $region23: #{tpu_custom_call.1} parent=11 // pred_region
          _
        $region24: #{tpu_custom_call.1} parent=11 // pred_fallthru
          _
        // Predicated region
        $region25: #{tpu_custom_call.1} parent=11 // pred_check
          %p394 = pneg %p134
        $region26: #{tpu_custom_call.1} parent=11 // pred_check_branch
          %396 = sbr.rel (%p394) target = $region28
        $region27: #{tpu_custom_call.1} parent=11 // pred_region
          _
        $region28: #{tpu_custom_call.1} parent=11 // pred_fallthru
          _
        // Predicated region
        $region29: #{tpu_custom_call.1} parent=11 // pred_check
          %p397 = pneg %p155
        $region30: #{tpu_custom_call.1} parent=11 // pred_check_branch
          %399 = sbr.rel (%p397) target = $region32
        $region31: #{tpu_custom_call.1} parent=11 // pred_region
          _
        $region32: #{tpu_custom_call.1} parent=11 // pred_fallthru
          _
        // Predicated region
        $region33: #{tpu_custom_call.1} parent=11 // pred_check
          %p400 = pneg %p176
        $region34: #{tpu_custom_call.1} parent=11 // pred_check_branch
          %402 = sbr.rel (%p400) target = $region36
        $region35: #{tpu_custom_call.1} parent=11 // pred_region
          _
        $region36: #{tpu_custom_call.1} parent=11 // pred_fallthru
          _
        // Predicated region
        $region37: #{tpu_custom_call.1} parent=11 // pred_check
          %p403 = pneg %p197
        $region38: #{tpu_custom_call.1} parent=11 // pred_check_branch
          %405 = sbr.rel (%p403) target = $region40
        $region39: #{tpu_custom_call.1} parent=11 // pred_region
          _
        $region40: #{tpu_custom_call.1} parent=11 // pred_fallthru
          _
        // Predicated region
        $region41: #{tpu_custom_call.1} parent=11 // pred_check
          %p406 = pneg %p218
        $region42: #{tpu_custom_call.1} parent=11 // pred_check_branch
          %408 = sbr.rel (%p406) target = $region44
        $region43: #{tpu_custom_call.1} parent=11 // pred_region
          _
        $region44: #{tpu_custom_call.1} parent=11 // pred_fallthru
          _
        // Predicated region
        $region45: #{tpu_custom_call.1} parent=11 // pred_check
          %p409 = pneg %p239
        $region46: #{tpu_custom_call.1} parent=11 // pred_check_branch
          %411 = sbr.rel (%p409) target = $region48
        $region47: #{tpu_custom_call.1} parent=11 // pred_region
          _
        $region48: #{tpu_custom_call.1} parent=11 // pred_fallthru
          _
        // Predicated region
        $region49: #{tpu_custom_call.1} parent=11 // pred_check
          %p412 = pneg %p260
        $region50: #{tpu_custom_call.1} parent=11 // pred_check_branch
          %414 = sbr.rel (%p412) target = $region52
        $region51: #{tpu_custom_call.1} parent=11 // pred_region
          _
        $region52: #{tpu_custom_call.1} parent=11 // pred_fallthru
          _
        // Predicated region
        $region53: #{tpu_custom_call.1} parent=11 // pred_check
          %p415 = pneg %p281
        $region54: #{tpu_custom_call.1} parent=11 // pred_check_branch
          %417 = sbr.rel (%p415) target = $region56
        $region55: #{tpu_custom_call.1} parent=11 // pred_region
          _
        $region56: #{tpu_custom_call.1} parent=11 // pred_fallthru
          _
        // Predicated region
        $region57: #{tpu_custom_call.1} parent=11 // pred_check
          %p418 = pneg %p302
        $region58: #{tpu_custom_call.1} parent=11 // pred_check_branch
          %420 = sbr.rel (%p418) target = $region60
        $region59: #{tpu_custom_call.1} parent=11 // pred_region
          _
        $region60: #{tpu_custom_call.1} parent=11 // pred_fallthru
          _
        // Predicated region
        $region61: #{tpu_custom_call.1} parent=11 // pred_check
          %p421 = pneg %p323
        $region62: #{tpu_custom_call.1} parent=11 // pred_check_branch
          %423 = sbr.rel (%p421) target = $region64
        $region63: #{tpu_custom_call.1} parent=11 // pred_region
          _
        $region64: #{tpu_custom_call.1} parent=11 // pred_fallthru
          _
        // Predicated region
        $region65: #{tpu_custom_call.1} parent=11 // pred_check
          %p424 = pneg %p344
        $region66: #{tpu_custom_call.1} parent=11 // pred_check_branch
          %426 = sbr.rel (%p424) target = $region68
        $region67: #{tpu_custom_call.1} parent=11 // pred_region
          _
        $region68: #{tpu_custom_call.1} parent=11 // pred_fallthru
          _
      $region12: #{tpu_custom_call.1} parent=5 // pred_fallthru
        _
      %p427 = scmp.lt.s32.totalorder %s24, 2
      // Predicated region
      $region69: #{tpu_custom_call.1} parent=5 // pred_check
        %p428 = pneg %p427
      $region70: #{tpu_custom_call.1} parent=5 // pred_check_branch
        %430 = sbr.rel (%p428) target = $region72
      $region71: #{tpu_custom_call.1} parent=5 // pred_region
        // Predicated region
        $region73: #{tpu_custom_call.1} parent=71 // pred_check
          %p431 = pneg %p44
        $region74: #{tpu_custom_call.1} parent=71 // pred_check_branch
          %433 = sbr.rel (%p431) target = $region76
        $region75: #{tpu_custom_call.1} parent=71 // pred_region
          %s434 = smul.u32 2, %s24
          %p435 = scmp.lt.s32.totalorder %s434, 3
          %s436 = scalar_select %p435, %s434, 3
          %s437 = smul.addr %s436, 7
          %s438 = smul.addr %s437, 8
          %s439 = scalar_lea.vmem %s0, %s438
          %s440 = smul.u32 2, %s24
        $region76: #{tpu_custom_call.1} parent=71 // pred_fallthru
          _
      $region72: #{tpu_custom_call.1} parent=5 // pred_fallthru
        _
      %p441 = scmp.le.s32.totalorder 1, %s24
      %p442 = scmp.lt.s32.totalorder %s24, 3
      %p443 = pnand %p441, %p442
      %p444 = pneg %p443
      // Predicated region
      $region77: #{tpu_custom_call.1} parent=5 // pred_check
        _
      $region78: #{tpu_custom_call.1} parent=5 // pred_check_branch
        %446 = sbr.rel (%p443) target = $region80
      $region79: #{tpu_custom_call.1} parent=5 // pred_region
        %s447 = ssub.s32 %s24, 1
        %s448 = smul.u32 2, %s29
        %p449 = scmp.lt.s32.totalorder %s448, 3
        %s450 = scalar_select %p449, %s448, 3
        %s451 = smul.addr %s450, 7
        %s452 = smul.addr %s451, 8
        %s453 = scalar_lea.vmem %s0, %s452
        %p454 = pneg %p50
        %p455 = pneg %p47
        %p456 = pneg %p71
        %p457 = pneg %p68
        %p458 = pneg %p92
        %p459 = pneg %p89
        %p460 = pneg %p113
        %p461 = pneg %p110
        %p462 = pneg %p134
        %p463 = pneg %p131
        %p464 = pneg %p155
        %p465 = pneg %p152
        %p466 = pneg %p176
        %p467 = pneg %p173
        %p468 = pneg %p197
        %p469 = pneg %p194
        %p470 = pneg %p218
        %p471 = pneg %p215
        %p472 = pneg %p239
        %p473 = pneg %p236
        %p474 = pneg %p260
        %p475 = pneg %p257
        %p476 = pneg %p281
        %p477 = pneg %p278
        %p478 = pneg %p302
        %p479 = pneg %p299
        %p480 = pneg %p323
        %p481 = pneg %p320
        %p482 = pneg %p344
        %p483 = pneg %p341
        %p484 = pneg %p370
        %p485 = pneg %p367
        %s486 = sand.u32 %s357, 1
        %s487 = scalar_lea.sflag [#allocation3], %s486
        %s488 = sand.u32 %s357, 1
        %s489 = smul.addr %s488, 112
        %s490 = scalar_lea.vmem [#allocation2], %s489
        %s491 = smul.u32 2, %s29
        %p492 = scmp.lt.s32.totalorder %s491, 3
        %s493 = scalar_select %p492, %s491, 3
        %s494 = smul.addr %s493, 7
        %s495 = smul.addr %s494, 8
        %s496 = scalar_lea.vmem %s0, %s495
        %s497 = smul.u32 2, %s29
        %s498 = smul.u32 2, %s29
        %v500 = vld [vmem:[%s496] sm:$0xff]
        %v501 = vld [vmem:[%s496 + $0x8] sm:$0xff]
        %v502 = vld [vmem:[%s496 + $0x10] sm:$0xff]
        %v503 = vld [vmem:[%s496 + $0x18] sm:$0xff]
        %v504 = vld [vmem:[%s496 + $0x20] sm:$0xff]
        %v505 = vld [vmem:[%s496 + $0x28] sm:$0xff]
        %v506 = vld [vmem:[%s496 + $0x30] sm:$0xff]
        %v507 = vld [vmem:[%s496 + $0x38] sm:$0xff]
        %v508 = vld [vmem:[%s496 + $0x40] sm:$0xff]
        %v509 = vld [vmem:[%s496 + $0x48] sm:$0xff]
        %v510 = vld [vmem:[%s496 + $0x50] sm:$0xff]
        %v511 = vld [vmem:[%s496 + $0x58] sm:$0xff]
        %v512 = vld [vmem:[%s496 + $0x60] sm:$0xff]
        %v513 = vld [vmem:[%s496 + $0x68] sm:$0xff]
        %v514 = vld [vmem:[%s1] sm:$0xf]
        %v515 = vld [vmem:[%s1 + $0x4] sm:$0xf]
        %v516 = vld [vmem:[%s1 + $0x8] sm:$0xf]
        %v517 = vld [vmem:[%s1 + $0xc] sm:$0xf]
        %v518 = vld [vmem:[%s1 + $0x10] sm:$0xf]
        %v519 = vld [vmem:[%s1 + $0x14] sm:$0xf]
        %v520 = vld [vmem:[%s1 + $0x18] sm:$0xf]
        %v521 = vld [vmem:[%s1 + $0x1c] sm:$0xf]
        %v522 = vld [vmem:[%s1 + $0x20] sm:$0xf]
        %v523 = vld [vmem:[%s1 + $0x24] sm:$0xf]
        %v524 = vld [vmem:[%s1 + $0x28] sm:$0xf]
        %v525 = vld [vmem:[%s1 + $0x2c] sm:$0xf]
        %v526 = vld [vmem:[%s1 + $0x30] sm:$0xf]
        %v527 = vld [vmem:[%s1 + $0x34] sm:$0xf]
        %v528 = vld [vmem:[%s1 + $0x38] sm:$0xf]
        %v529 = vld [vmem:[%s1 + $0x3c] sm:$0xf]
        %v530 = vld [vmem:[%s1 + $0x40] sm:$0xf]
        %v531 = vld [vmem:[%s1 + $0x44] sm:$0xf]
        %v532 = vld [vmem:[%s1 + $0x48] sm:$0xf]
        %v533 = vld [vmem:[%s1 + $0x4c] sm:$0xf]
        %v534 = vld [vmem:[%s1 + $0x50] sm:$0xf]
        %v535 = vld [vmem:[%s1 + $0x54] sm:$0xf]
        %v536 = vld [vmem:[%s1 + $0x58] sm:$0xf]
        %v537 = vld [vmem:[%s1 + $0x5c] sm:$0xf]
        %v538 = vld [vmem:[%s1 + $0x60] sm:$0xf]
        %v539 = vld [vmem:[%s1 + $0x64] sm:$0xf]
        %v540 = vld [vmem:[%s1 + $0x68] sm:$0xf]
        %v541 = vld [vmem:[%s1 + $0x6c] sm:$0xf]
        %v542 = vld [vmem:[%s1 + $0x70] sm:$0xf]
        %v543 = vld [vmem:[%s1 + $0x74] sm:$0xf]
        %v544 = vld [vmem:[%s1 + $0x78] sm:$0xf]
        %v545 = vld [vmem:[%s1 + $0x7c] sm:$0xf]
        %v546 = vld [vmem:[%s1 + $0x80] sm:$0xf]
        %v547 = vld [vmem:[%s1 + $0x84] sm:$0xf]
        %v548 = vld [vmem:[%s1 + $0x88] sm:$0xf]
        %v549 = vld [vmem:[%s1 + $0x8c] sm:$0xf]
        %v550 = vld [vmem:[%s1 + $0x90] sm:$0xf]
        %v551 = vld [vmem:[%s1 + $0x94] sm:$0xf]
        %v552 = vld [vmem:[%s1 + $0x98] sm:$0xf]
        %v553 = vld [vmem:[%s1 + $0x9c] sm:$0xf]
        %v554 = vld [vmem:[%s1 + $0xa0] sm:$0xf]
        %v555 = vld [vmem:[%s1 + $0xa4] sm:$0xf]
        %v556 = vld [vmem:[%s1 + $0xa8] sm:$0xf]
        %v557 = vld [vmem:[%s1 + $0xac] sm:$0xf]
        %v558 = vld [vmem:[%s1 + $0xb0] sm:$0xf]
        %v559 = vld [vmem:[%s1 + $0xb4] sm:$0xf]
        %v560 = vld [vmem:[%s1 + $0xb8] sm:$0xf]
        %v561 = vld [vmem:[%s1 + $0xbc] sm:$0xf]
        %v562 = vld [vmem:[%s1 + $0xc0] sm:$0xf]
        %v563 = vld [vmem:[%s1 + $0xc4] sm:$0xf]
        %v564 = vld [vmem:[%s1 + $0xc8] sm:$0xf]
        %v565 = vld [vmem:[%s1 + $0xcc] sm:$0xf]
        %v566 = vld [vmem:[%s1 + $0xd0] sm:$0xf]
        %v567 = vld [vmem:[%s1 + $0xd4] sm:$0xf]
        %v568 = vld [vmem:[%s1 + $0xd8] sm:$0xf]
        %v569 = vld [vmem:[%s1 + $0xdc] sm:$0xf]
        %v570 = vld [vmem:[%s1 + $0xe0] sm:$0xf]
        %v571 = vld [vmem:[%s1 + $0xe4] sm:$0xf]
        %v572 = vld [vmem:[%s1 + $0xe8] sm:$0xf]
        %v573 = vld [vmem:[%s1 + $0xec] sm:$0xf]
        %v574 = vld [vmem:[%s1 + $0xf0] sm:$0xf]
        %v575 = vld [vmem:[%s1 + $0xf4] sm:$0xf]
        %v576 = vld [vmem:[%s1 + $0xf8] sm:$0xf]
        %v577 = vld [vmem:[%s1 + $0xfc] sm:$0xf]
        %v578 = vld [vmem:[%s1 + $0x100] sm:$0xf]
        %v579 = vld [vmem:[%s1 + $0x104] sm:$0xf]
        %v580 = vld [vmem:[%s1 + $0x108] sm:$0xf]
        %v581 = vld [vmem:[%s1 + $0x10c] sm:$0xf]
        %v582 = vld [vmem:[%s1 + $0x110] sm:$0xf]
        %v583 = vld [vmem:[%s1 + $0x114] sm:$0xf]
        %v584 = vld [vmem:[%s1 + $0x118] sm:$0xf]
        %v585 = vld [vmem:[%s1 + $0x11c] sm:$0xf]
        %v586 = vld [vmem:[%s1 + $0x120] sm:$0xf]
        %v587 = vld [vmem:[%s1 + $0x124] sm:$0xf]
        %v588 = vld [vmem:[%s1 + $0x128] sm:$0xf]
        %v589 = vld [vmem:[%s1 + $0x12c] sm:$0xf]
        %v590 = vld [vmem:[%s1 + $0x130] sm:$0xf]
        %v591 = vld [vmem:[%s1 + $0x134] sm:$0xf]
        %v592 = vld [vmem:[%s1 + $0x138] sm:$0xf]
        %v593 = vld [vmem:[%s1 + $0x13c] sm:$0xf]
        %v594 = vld [vmem:[%s1 + $0x140] sm:$0xf]
        %v595 = vld [vmem:[%s1 + $0x144] sm:$0xf]
        %v596 = vld [vmem:[%s1 + $0x148] sm:$0xf]
        %v597 = vld [vmem:[%s1 + $0x14c] sm:$0xf]
        %v598 = vld [vmem:[%s1 + $0x150] sm:$0xf]
        %v599 = vld [vmem:[%s1 + $0x154] sm:$0xf]
        %v600 = vld [vmem:[%s1 + $0x158] sm:$0xf]
        %v601 = vld [vmem:[%s1 + $0x15c] sm:$0xf]
        %v602 = vld [vmem:[%s1 + $0x160] sm:$0xf]
        %v603 = vld [vmem:[%s1 + $0x164] sm:$0xf]
        %v604 = vld [vmem:[%s1 + $0x168] sm:$0xf]
        %v605 = vld [vmem:[%s1 + $0x16c] sm:$0xf]
        %v606 = vld [vmem:[%s1 + $0x170] sm:$0xf]
        %v607 = vld [vmem:[%s1 + $0x174] sm:$0xf]
        %v608 = vld [vmem:[%s1 + $0x178] sm:$0xf]
        %v609 = vld [vmem:[%s1 + $0x17c] sm:$0xf]
        %v610 = vld [vmem:[%s1 + $0x180] sm:$0xf]
        %v611 = vld [vmem:[%s1 + $0x184] sm:$0xf]
        %v612 = vld [vmem:[%s2] sm:$0x1]
        %v613 = vpack.c.bf16 %v507, %v500
        %v614 = vpack.c.bf16 %v508, %v501
        %v615 = vpack.c.bf16 %v509, %v502
        %v616 = vpack.c.bf16 %v510, %v503
        %v617 = vpack.c.bf16 %v511, %v504
        %v618 = vpack.c.bf16 %v512, %v505
        %v619 = vpack.c.bf16 %v513, %v506
        %v621 = vperm.slane %v612, 0
        %v721 = vunpack.c.l.b16 %v514
        %v722 = vunpack.c.l.b16 %v515
        %v723 = vunpack.c.l.b16 %v516
        %v724 = vunpack.c.l.b16 %v517
        %v725 = vunpack.c.l.b16 %v518
        %v726 = vunpack.c.l.b16 %v519
        %v727 = vunpack.c.l.b16 %v520
        %v728 = vunpack.c.l.b16 %v521
        %v729 = vunpack.c.l.b16 %v522
        %v730 = vunpack.c.l.b16 %v523
        %v731 = vunpack.c.l.b16 %v524
        %v732 = vunpack.c.l.b16 %v525
        %v733 = vunpack.c.l.b16 %v526
        %v734 = vunpack.c.l.b16 %v527
        %v735 = vunpack.c.l.b16 %v528
        %v736 = vunpack.c.l.b16 %v529
        %v737 = vunpack.c.l.b16 %v530
        %v738 = vunpack.c.l.b16 %v531
        %v739 = vunpack.c.l.b16 %v532
        %v740 = vunpack.c.l.b16 %v533
        %v741 = vunpack.c.l.b16 %v534
        %v742 = vunpack.c.l.b16 %v535
        %v743 = vunpack.c.l.b16 %v536
        %v744 = vunpack.c.l.b16 %v537
        %v745 = vunpack.c.l.b16 %v538
        %v746 = vunpack.c.l.b16 %v539
        %v747 = vunpack.c.l.b16 %v540
        %v748 = vunpack.c.l.b16 %v541
        %v749 = vunpack.c.l.b16 %v542
        %v750 = vunpack.c.l.b16 %v543
        %v751 = vunpack.c.l.b16 %v544
        %v752 = vunpack.c.l.b16 %v545
        %v753 = vunpack.c.l.b16 %v546
        %v754 = vunpack.c.l.b16 %v547
        %v755 = vunpack.c.l.b16 %v548
        %v756 = vunpack.c.l.b16 %v549
        %v757 = vunpack.c.l.b16 %v550
        %v758 = vunpack.c.l.b16 %v551
        %v759 = vunpack.c.l.b16 %v552
        %v760 = vunpack.c.l.b16 %v553
        %v761 = vunpack.c.l.b16 %v554
        %v762 = vunpack.c.l.b16 %v555
        %v763 = vunpack.c.l.b16 %v556
        %v764 = vunpack.c.l.b16 %v557
        %v765 = vunpack.c.l.b16 %v558
        %v766 = vunpack.c.l.b16 %v559
        %v767 = vunpack.c.l.b16 %v560
        %v768 = vunpack.c.l.b16 %v561
        %v769 = vunpack.c.l.b16 %v562
        %v770 = vunpack.c.l.b16 %v563
        %v771 = vunpack.c.l.b16 %v564
        %v772 = vunpack.c.l.b16 %v565
        %v773 = vunpack.c.l.b16 %v566
        %v774 = vunpack.c.l.b16 %v567
        %v775 = vunpack.c.l.b16 %v568
        %v776 = vunpack.c.l.b16 %v569
        %v777 = vunpack.c.l.b16 %v570
        %v778 = vunpack.c.l.b16 %v571
        %v779 = vunpack.c.l.b16 %v572
        %v780 = vunpack.c.l.b16 %v573
        %v781 = vunpack.c.l.b16 %v574
        %v782 = vunpack.c.l.b16 %v575
        %v783 = vunpack.c.l.b16 %v576
        %v784 = vunpack.c.l.b16 %v577
        %v785 = vunpack.c.l.b16 %v578
        %v786 = vunpack.c.l.b16 %v579
        %v787 = vunpack.c.l.b16 %v580
        %v788 = vunpack.c.l.b16 %v581
        %v789 = vunpack.c.l.b16 %v582
        %v790 = vunpack.c.l.b16 %v583
        %v791 = vunpack.c.l.b16 %v584
        %v792 = vunpack.c.l.b16 %v585
        %v793 = vunpack.c.l.b16 %v586
        %v794 = vunpack.c.l.b16 %v587
        %v795 = vunpack.c.l.b16 %v588
        %v796 = vunpack.c.l.b16 %v589
        %v797 = vunpack.c.l.b16 %v590
        %v798 = vunpack.c.l.b16 %v591
        %v799 = vunpack.c.l.b16 %v592
        %v800 = vunpack.c.l.b16 %v593
        %v801 = vunpack.c.l.b16 %v594
        %v802 = vunpack.c.l.b16 %v595
        %v803 = vunpack.c.l.b16 %v596
        %v804 = vunpack.c.l.b16 %v597
        %v805 = vunpack.c.l.b16 %v598
        %v806 = vunpack.c.l.b16 %v599
        %v807 = vunpack.c.l.b16 %v600
        %v808 = vunpack.c.l.b16 %v601
        %v809 = vunpack.c.l.b16 %v602
        %v810 = vunpack.c.l.b16 %v603
        %v811 = vunpack.c.l.b16 %v604
        %v812 = vunpack.c.l.b16 %v605
        %v813 = vunpack.c.l.b16 %v606
        %v814 = vunpack.c.l.b16 %v607
        %v815 = vunpack.c.l.b16 %v608
        %v816 = vunpack.c.l.b16 %v609
        %v817 = vunpack.c.l.b16 %v610
        %v818 = vunpack.c.l.b16 %v611
        %v819 = vpack.c.b16 %v722, %v721
        %v820 = vpack.c.b16 %v724, %v723
        %v821 = vpack.c.b16 %v726, %v725
        %v822 = vpack.c.b16 %v728, %v727
        %v823 = vpack.c.b16 %v730, %v729
        %v824 = vpack.c.b16 %v732, %v731
        %v825 = vpack.c.b16 %v734, %v733
        %v826 = vpack.c.b16 %v736, %v735
        %v827 = vpack.c.b16 %v738, %v737
        %v828 = vpack.c.b16 %v740, %v739
        %v829 = vpack.c.b16 %v742, %v741
        %v830 = vpack.c.b16 %v744, %v743
        %v831 = vpack.c.b16 %v746, %v745
        %v832 = vpack.c.b16 %v748, %v747
        %v833 = vpack.c.b16 %v750, %v749
        %v834 = vpack.c.b16 %v752, %v751
        %v835 = vpack.c.b16 %v754, %v753
        %v836 = vpack.c.b16 %v756, %v755
        %v837 = vpack.c.b16 %v758, %v757
        %v838 = vpack.c.b16 %v760, %v759
        %v839 = vpack.c.b16 %v762, %v761
        %v840 = vpack.c.b16 %v764, %v763
        %v841 = vpack.c.b16 %v766, %v765
        %v842 = vpack.c.b16 %v768, %v767
        %v843 = vpack.c.b16 %v770, %v769
        %v844 = vpack.c.b16 %v772, %v771
        %v845 = vpack.c.b16 %v774, %v773
        %v846 = vpack.c.b16 %v776, %v775
        %v847 = vpack.c.b16 %v778, %v777
        %v848 = vpack.c.b16 %v780, %v779
        %v849 = vpack.c.b16 %v782, %v781
        %v850 = vpack.c.b16 %v784, %v783
        %v851 = vpack.c.b16 %v786, %v785
        %v852 = vpack.c.b16 %v788, %v787
        %v853 = vpack.c.b16 %v790, %v789
        %v854 = vpack.c.b16 %v792, %v791
        %v855 = vpack.c.b16 %v794, %v793
        %v856 = vpack.c.b16 %v796, %v795
        %v857 = vpack.c.b16 %v798, %v797
        %v858 = vpack.c.b16 %v800, %v799
        %v859 = vpack.c.b16 %v802, %v801
        %v860 = vpack.c.b16 %v804, %v803
        %v861 = vpack.c.b16 %v806, %v805
        %v862 = vpack.c.b16 %v808, %v807
        %v863 = vpack.c.b16 %v810, %v809
        %v864 = vpack.c.b16 %v812, %v811
        %v865 = vpack.c.b16 %v814, %v813
        %v866 = vpack.c.b16 %v816, %v815
        %v867 = vpack.c.b16 %v818, %v817
        %vm917 = vcmask 130048
        %v919 = vsel %vm917, %v619, 0
        %921 = vmatpush.bf16.msra.mxu0 %v826
        %922 = vmatpush.bf16.msra.mxu0 %v825
        %923 = vmatpush.bf16.msra.mxu0 %v824
        %924 = vmatpush.bf16.msra.mxu0 %v823
        %925 = vmatpush.bf16.msra.mxu0 %v822
        %926 = vmatpush.bf16.msra.mxu0 %v821
        %927 = vmatpush.bf16.msra.mxu0 %v820
        %928 = vmatpush.bf16.msra.mxu0 %v819
        %929 = vmatmul.bf16.gmra.mxu0 %v613
        %v930 = vpop.f32.mrf.mxu0
        %v931 = vadd.f32 %v621, %v930
        %v932 = vpop.f32.mrf.mxu0
        %v933 = vadd.f32 %v621, %v932
        %934 = vdwg.mxu0
        %935 = vmatpush.bf16.msra.mxu0 %v834
        %936 = vmatpush.bf16.msra.mxu0 %v833
        %937 = vmatpush.bf16.msra.mxu0 %v832
        %938 = vmatpush.bf16.msra.mxu0 %v831
        %939 = vmatpush.bf16.msra.mxu0 %v830
        %940 = vmatpush.bf16.msra.mxu0 %v829
        %941 = vmatpush.bf16.msra.mxu0 %v828
        %942 = vmatpush.bf16.msra.mxu0 %v827
        %943 = vmatmul.bf16.gmra.mxu0 %v614
        %v944 = vpop.f32.mrf.mxu0
        %v945 = vadd.f32 %v931, %v944
        %v946 = vpop.f32.mrf.mxu0
        %v947 = vadd.f32 %v933, %v946
        %948 = vdwg.mxu0
        %949 = vmatpush.bf16.msra.mxu0 %v842
        %950 = vmatpush.bf16.msra.mxu0 %v841
        %951 = vmatpush.bf16.msra.mxu0 %v840
        %952 = vmatpush.bf16.msra.mxu0 %v839
        %953 = vmatpush.bf16.msra.mxu0 %v838
        %954 = vmatpush.bf16.msra.mxu0 %v837
        %955 = vmatpush.bf16.msra.mxu0 %v836
        %956 = vmatpush.bf16.msra.mxu0 %v835
        %957 = vmatmul.bf16.gmra.mxu0 %v615
        %v958 = vpop.f32.mrf.mxu0
        %v959 = vadd.f32 %v945, %v958
        %v960 = vpop.f32.mrf.mxu0
        %v961 = vadd.f32 %v947, %v960
        %962 = vdwg.mxu0
        %963 = vmatpush.bf16.msra.mxu0 %v850
        %964 = vmatpush.bf16.msra.mxu0 %v849
        %965 = vmatpush.bf16.msra.mxu0 %v848
        %966 = vmatpush.bf16.msra.mxu0 %v847
        %967 = vmatpush.bf16.msra.mxu0 %v846
        %968 = vmatpush.bf16.msra.mxu0 %v845
        %969 = vmatpush.bf16.msra.mxu0 %v844
        %970 = vmatpush.bf16.msra.mxu0 %v843
        %971 = vmatmul.bf16.gmra.mxu0 %v616
        %v972 = vpop.f32.mrf.mxu0
        %v973 = vadd.f32 %v959, %v972
        %v974 = vpop.f32.mrf.mxu0
        %v975 = vadd.f32 %v961, %v974
        %976 = vdwg.mxu0
        %977 = vmatpush.bf16.msra.mxu0 %v858
        %978 = vmatpush.bf16.msra.mxu0 %v857
        %979 = vmatpush.bf16.msra.mxu0 %v856
        %980 = vmatpush.bf16.msra.mxu0 %v855
        %981 = vmatpush.bf16.msra.mxu0 %v854
        %982 = vmatpush.bf16.msra.mxu0 %v853
        %983 = vmatpush.bf16.msra.mxu0 %v852
        %984 = vmatpush.bf16.msra.mxu0 %v851
        %985 = vmatmul.bf16.gmra.mxu0 %v617
        %v986 = vpop.f32.mrf.mxu0
        %v987 = vadd.f32 %v973, %v986
        %v988 = vpop.f32.mrf.mxu0
        %v989 = vadd.f32 %v975, %v988
        %990 = vdwg.mxu0
        %991 = vmatpush.bf16.msra.mxu0 %v866
        %992 = vmatpush.bf16.msra.mxu0 %v865
        %993 = vmatpush.bf16.msra.mxu0 %v864
        %994 = vmatpush.bf16.msra.mxu0 %v863
        %995 = vmatpush.bf16.msra.mxu0 %v862
        %996 = vmatpush.bf16.msra.mxu0 %v861
        %997 = vmatpush.bf16.msra.mxu0 %v860
        %998 = vmatpush.bf16.msra.mxu0 %v859
        %999 = vmatmul.bf16.gmra.mxu0 %v618
        %v1000 = vpop.f32.mrf.mxu0
        %v1001 = vadd.f32 %v987, %v1000
        %v1002 = vpop.f32.mrf.mxu0
        %v1003 = vadd.f32 %v989, %v1002
        %1004 = vdwg.mxu0
        %1005 = vmatpush.bf16.msra.mxu0 0
        %1006 = vmatpush.bf16.msra.mxu0 0
        %1007 = vmatpush.bf16.msra.mxu0 0
        %1008 = vmatpush.bf16.msra.mxu0 0
        %1009 = vmatpush.bf16.msra.mxu0 0
        %1010 = vmatpush.bf16.msra.mxu0 0
        %1011 = vmatpush.bf16.msra.mxu0 0
        %1012 = vmatpush.bf16.msra.mxu0 %v867
        %1013 = vmatmul.bf16.gmra.mxu0 %v919
        %v1014 = vpop.f32.mrf.mxu0
        %v1015 = vadd.f32 %v1001, %v1014
        %v1016 = vpop.f32.mrf.mxu0
        %v1017 = vadd.f32 %v1003, %v1016
        %1018 = vdwg.mxu0
        %v1019 = vmax.f32 %v1015, 0.0
        %v1020 = vmax.f32 %v1017, 0.0
        %v1021 = vld [vmem:[%s3] sm:$0xf]
        %v1022 = vld [vmem:[%s3 + $0x4] sm:$0xf]
        %v1023 = vld [vmem:[%s3 + $0x8] sm:$0xf]
        %v1024 = vld [vmem:[%s3 + $0xc] sm:$0xf]
        %v1025 = vld [vmem:[%s3 + $0x10] sm:$0xf]
        %v1026 = vld [vmem:[%s3 + $0x14] sm:$0xf]
        %v1027 = vld [vmem:[%s3 + $0x18] sm:$0xf]
        %v1028 = vld [vmem:[%s3 + $0x1c] sm:$0xf]
        %v1029 = vld [vmem:[%s3 + $0x20] sm:$0xf]
        %v1030 = vld [vmem:[%s3 + $0x24] sm:$0xf]
        %v1031 = vld [vmem:[%s3 + $0x28] sm:$0xf]
        %v1032 = vld [vmem:[%s3 + $0x2c] sm:$0xf]
        %v1033 = vld [vmem:[%s3 + $0x30] sm:$0xf]
        %v1034 = vld [vmem:[%s3 + $0x34] sm:$0xf]
        %v1035 = vld [vmem:[%s3 + $0x38] sm:$0xf]
        %v1036 = vld [vmem:[%s3 + $0x3c] sm:$0xf]
        %v1037 = vld [vmem:[%s4] sm:$0x1]
        %v1038 = vpack.c.bf16 %v1020, %v1019
        %v1040 = vperm.slane %v1037, 0
        %v1058 = vunpack.c.l.b16 %v1021
        %v1059 = vunpack.c.l.b16 %v1022
        %v1060 = vunpack.c.l.b16 %v1023
        %v1061 = vunpack.c.l.b16 %v1024
        %v1062 = vunpack.c.l.b16 %v1025
        %v1063 = vunpack.c.l.b16 %v1026
        %v1064 = vunpack.c.l.b16 %v1027
        %v1065 = vunpack.c.l.b16 %v1028
        %v1066 = vunpack.c.l.b16 %v1029
        %v1067 = vunpack.c.l.b16 %v1030
        %v1068 = vunpack.c.l.b16 %v1031
        %v1069 = vunpack.c.l.b16 %v1032
        %v1070 = vunpack.c.l.b16 %v1033
        %v1071 = vunpack.c.l.b16 %v1034
        %v1072 = vunpack.c.l.b16 %v1035
        %v1073 = vunpack.c.l.b16 %v1036
        %v1074 = vpack.c.b16 %v1059, %v1058
        %v1075 = vpack.c.b16 %v1061, %v1060
        %v1076 = vpack.c.b16 %v1063, %v1062
        %v1077 = vpack.c.b16 %v1065, %v1064
        %v1078 = vpack.c.b16 %v1067, %v1066
        %v1079 = vpack.c.b16 %v1069, %v1068
        %v1080 = vpack.c.b16 %v1071, %v1070
        %v1081 = vpack.c.b16 %v1073, %v1072
        %1090 = vmatpush.bf16.msra.mxu0 %v1081
        %1091 = vmatpush.bf16.msra.mxu0 %v1080
        %1092 = vmatpush.bf16.msra.mxu0 %v1079
        %1093 = vmatpush.bf16.msra.mxu0 %v1078
        %1094 = vmatpush.bf16.msra.mxu0 %v1077
        %1095 = vmatpush.bf16.msra.mxu0 %v1076
        %1096 = vmatpush.bf16.msra.mxu0 %v1075
        %1097 = vmatpush.bf16.msra.mxu0 %v1074
        %1098 = vmatmul.bf16.gmra.mxu0 %v1038
        %v1099 = vpop.f32.mrf.mxu0
        %v1100 = vadd.f32 %v1040, %v1099
        %v1101 = vpop.f32.mrf.mxu0
        %v1102 = vadd.f32 %v1040, %v1101
        %1103 = vdwg.mxu0
        %v1104 = vmax.f32 %v1100, 0.0
        %v1105 = vmax.f32 %v1102, 0.0
        %v1106 = vld [vmem:[%s5] sm:$0xf]
        %v1107 = vld [vmem:[%s5 + $0x4] sm:$0xf]
        %v1108 = vld [vmem:[%s5 + $0x8] sm:$0xf]
        %v1109 = vld [vmem:[%s5 + $0xc] sm:$0xf]
        %v1110 = vld [vmem:[%s5 + $0x10] sm:$0xf]
        %v1111 = vld [vmem:[%s5 + $0x14] sm:$0xf]
        %v1112 = vld [vmem:[%s5 + $0x18] sm:$0xf]
        %v1113 = vld [vmem:[%s5 + $0x1c] sm:$0xf]
        %v1114 = vld [vmem:[%s6] sm:$0x1]
        %v1115 = vpack.c.bf16 %v1105, %v1104
        %v1117 = vperm.slane %v1114, 0
        %v1127 = vunpack.c.l.b16 %v1106
        %v1128 = vunpack.c.l.b16 %v1107
        %v1129 = vunpack.c.l.b16 %v1108
        %v1130 = vunpack.c.l.b16 %v1109
        %v1131 = vunpack.c.l.b16 %v1110
        %v1132 = vunpack.c.l.b16 %v1111
        %v1133 = vunpack.c.l.b16 %v1112
        %v1134 = vunpack.c.l.b16 %v1113
        %v1135 = vpack.c.b16 %v1128, %v1127
        %v1136 = vpack.c.b16 %v1130, %v1129
        %v1137 = vpack.c.b16 %v1132, %v1131
        %v1138 = vpack.c.b16 %v1134, %v1133
        %vm1143 = vcmask 523264
        %v1145 = vsel %vm1143, %v1115, 0
        %1147 = vmatpush.bf16.msra.mxu0 0
        %1148 = vmatpush.bf16.msra.mxu0 0
        %1149 = vmatpush.bf16.msra.mxu0 0
        %1150 = vmatpush.bf16.msra.mxu0 0
        %1151 = vmatpush.bf16.msra.mxu0 %v1138
        %1152 = vmatpush.bf16.msra.mxu0 %v1137
        %1153 = vmatpush.bf16.msra.mxu0 %v1136
        %1154 = vmatpush.bf16.msra.mxu0 %v1135
        %1155 = vmatmul.bf16.gmra.mxu0 %v1145
        %v1156 = vpop.f32.mrf.mxu0
        %v1157 = vadd.f32 %v1117, %v1156
        %v1158 = vpop.f32.mrf.mxu0
        %v1159 = vadd.f32 %v1117, %v1158
        %1160 = vdwg.mxu0
        %v1161 = vmax.f32 %v1157, 0.0
        %v1162 = vmax.f32 %v1159, 0.0
        %v1163 = vld [vmem:[%s7] sm:$0xf]
        %v1164 = vld [vmem:[%s7 + $0x4] sm:$0x3]
        %v1165 = vld [vmem:[%s8] sm:$0x1]
        %v1166 = vpack.c.bf16 %v1162, %v1161
        %v1168 = vperm.slane %v1165, 0
        %v1172 = vunpack.c.l.b16 %v1163
        %v1173 = vunpack.c.l.b16 %v1164
        %v1174 = vpack.c.b16 %v1173, %v1172
        %vm1175 = vcmask 97280
        %v1177 = vsel %vm1175, %v1166, 0
        %vm1179 = vcmask 1045504
        %v1181 = vsel %vm1179, %v1174, 0
        %1183 = vmatpush.bf16.msra.mxu0 0
        %1184 = vmatpush.bf16.msra.mxu0 0
        %1185 = vmatpush.bf16.msra.mxu0 0
        %1186 = vmatpush.bf16.msra.mxu0 0
        %1187 = vmatpush.bf16.msra.mxu0 0
        %1188 = vmatpush.bf16.msra.mxu0 0
        %1189 = vmatpush.bf16.msra.mxu0 0
        %1190 = vmatpush.bf16.msra.mxu0 %v1181
        %1191 = vmatmul.bf16.gmra.mxu0 %v1177
        %v1192 = vpop.f32.mrf.mxu0
        %v1193 = vadd.f32 %v1168, %v1192
        %v1194 = vpop.f32.mrf.mxu0
        %v1195 = vadd.f32 %v1168, %v1194
        %1196 = vdwg.mxu0
        %v1197 = vmax.f32 %v1193, 0.0
        %v1198 = vmax.f32 %v1195, 0.0
        %v1199 = vld [vmem:[%s9] sm:$0xf]
        %v1200 = vld [vmem:[%s9 + $0x4] sm:$0x3]
        %v1201 = vld [vmem:[%s10] sm:$0x1]
        %v1202 = vpack.c.bf16 %v1198, %v1197
        %v1204 = vperm.slane %v1201, 0
        %v1208 = vunpack.c.l.b16 %v1199
        %v1209 = vunpack.c.l.b16 %v1200
        %v1210 = vpack.c.b16 %v1209, %v1208
        %v1212 = vsel %vm1175, %v1202, 0
        %v1215 = vsel %vm1179, %v1210, 0
        %1217 = vmatpush.bf16.msra.mxu0 0
        %1218 = vmatpush.bf16.msra.mxu0 0
        %1219 = vmatpush.bf16.msra.mxu0 0
        %1220 = vmatpush.bf16.msra.mxu0 0
        %1221 = vmatpush.bf16.msra.mxu0 0
        %1222 = vmatpush.bf16.msra.mxu0 0
        %1223 = vmatpush.bf16.msra.mxu0 0
        %1224 = vmatpush.bf16.msra.mxu0 %v1215
        %1225 = vmatmul.bf16.gmra.mxu0 %v1212
        %v1226 = vpop.f32.mrf.mxu0
        %v1227 = vadd.f32 %v1204, %v1226
        %v1228 = vpop.f32.mrf.mxu0
        %v1229 = vadd.f32 %v1204, %v1228
        %1230 = vdwg.mxu0
        %v1231 = vmax.f32 %v1227, 0.0
        %v1232 = vmax.f32 %v1229, 0.0
        %v1233 = vld [vmem:[%s11] sm:$0xf]
        %v1234 = vld [vmem:[%s11 + $0x4] sm:$0xf]
        %v1235 = vld [vmem:[%s11 + $0x8] sm:$0xf]
        %v1236 = vld [vmem:[%s11 + $0xc] sm:$0xf]
        %v1237 = vld [vmem:[%s11 + $0x10] sm:$0xf]
        %v1238 = vld [vmem:[%s11 + $0x14] sm:$0xf]
        %v1239 = vld [vmem:[%s11 + $0x18] sm:$0xf]
        %v1240 = vld [vmem:[%s11 + $0x1c] sm:$0xf]
        %v1241 = vld [vmem:[%s12] sm:$0x1]
        %v1242 = vpack.c.bf16 %v1232, %v1231
        %v1244 = vperm.slane %v1241, 0
        %v1254 = vunpack.c.l.b16 %v1233
        %v1255 = vunpack.c.l.b16 %v1234
        %v1256 = vunpack.c.l.b16 %v1235
        %v1257 = vunpack.c.l.b16 %v1236
        %v1258 = vunpack.c.l.b16 %v1237
        %v1259 = vunpack.c.l.b16 %v1238
        %v1260 = vunpack.c.l.b16 %v1239
        %v1261 = vunpack.c.l.b16 %v1240
        %v1262 = vpack.c.b16 %v1255, %v1254
        %v1263 = vpack.c.b16 %v1257, %v1256
        %v1264 = vpack.c.b16 %v1259, %v1258
        %v1265 = vpack.c.b16 %v1261, %v1260
        %v1271 = vsel %vm1143, %v1242, 0
        %1273 = vmatpush.bf16.msra.mxu0 0
        %1274 = vmatpush.bf16.msra.mxu0 0
        %1275 = vmatpush.bf16.msra.mxu0 0
        %1276 = vmatpush.bf16.msra.mxu0 0
        %1277 = vmatpush.bf16.msra.mxu0 %v1265
        %1278 = vmatpush.bf16.msra.mxu0 %v1264
        %1279 = vmatpush.bf16.msra.mxu0 %v1263
        %1280 = vmatpush.bf16.msra.mxu0 %v1262
        %1281 = vmatmul.bf16.gmra.mxu0 %v1271
        %v1282 = vpop.f32.mrf.mxu0
        %v1283 = vadd.f32 %v1244, %v1282
        %v1284 = vpop.f32.mrf.mxu0
        %v1285 = vadd.f32 %v1244, %v1284
        %1286 = vdwg.mxu0
        %v1287 = vmax.f32 %v1283, 0.0
        %v1288 = vmax.f32 %v1285, 0.0
        %v1289 = vld [vmem:[%s13] sm:$0xff]
        %v1290 = vld [vmem:[%s13 + $0x8] sm:$0xff]
        %v1291 = vld [vmem:[%s13 + $0x10] sm:$0xff]
        %v1292 = vld [vmem:[%s13 + $0x18] sm:$0xf]
        %v1293 = vld [vmem:[%s13 + $0x1c] sm:$0xff]
        %v1294 = vld [vmem:[%s13 + $0x24] sm:$0xff]
        %v1295 = vld [vmem:[%s13 + $0x2c] sm:$0xff]
        %v1296 = vld [vmem:[%s13 + $0x34] sm:$0xf]
        %v1297 = vld [vmem:[%s13 + $0x38] sm:$0xff]
        %v1298 = vld [vmem:[%s13 + $0x40] sm:$0xff]
        %v1299 = vld [vmem:[%s13 + $0x48] sm:$0xff]
        %v1300 = vld [vmem:[%s13 + $0x50] sm:$0xf]
        %v1301 = vld [vmem:[%s13 + $0x54] sm:$0xff]
        %v1302 = vld [vmem:[%s13 + $0x5c] sm:$0xff]
        %v1303 = vld [vmem:[%s13 + $0x64] sm:$0xff]
        %v1304 = vld [vmem:[%s13 + $0x6c] sm:$0xf]
        %v1305 = vld [vmem:[%s13 + $0x70] sm:$0xff]
        %v1306 = vld [vmem:[%s13 + $0x78] sm:$0xff]
        %v1307 = vld [vmem:[%s13 + $0x80] sm:$0xff]
        %v1308 = vld [vmem:[%s13 + $0x88] sm:$0xf]
        %v1309 = vld [vmem:[%s13 + $0x8c] sm:$0xff]
        %v1310 = vld [vmem:[%s13 + $0x94] sm:$0xff]
        %v1311 = vld [vmem:[%s13 + $0x9c] sm:$0xff]
        %v1312 = vld [vmem:[%s13 + $0xa4] sm:$0xf]
        %v1313 = vld [vmem:[%s13 + $0xa8] sm:$0xff]
        %v1314 = vld [vmem:[%s13 + $0xb0] sm:$0xff]
        %v1315 = vld [vmem:[%s13 + $0xb8] sm:$0xff]
        %v1316 = vld [vmem:[%s13 + $0xc0] sm:$0xf]
        %v1317 = vld [vmem:[%s13 + $0xc4] sm:$0xff]
        %v1318 = vld [vmem:[%s13 + $0xcc] sm:$0xff]
        %v1319 = vld [vmem:[%s13 + $0xd4] sm:$0xff]
        %v1320 = vld [vmem:[%s13 + $0xdc] sm:$0xf]
        %v1321 = vld [vmem:[%s13 + $0xe0] sm:$0xff]
        %v1322 = vld [vmem:[%s13 + $0xe8] sm:$0xff]
        %v1323 = vld [vmem:[%s13 + $0xf0] sm:$0xff]
        %v1324 = vld [vmem:[%s13 + $0xf8] sm:$0xf]
        %v1325 = vld [vmem:[%s13 + $0xfc] sm:$0xff]
        %v1326 = vld [vmem:[%s13 + $0x104] sm:$0xff]
        %v1327 = vld [vmem:[%s13 + $0x10c] sm:$0xff]
        %v1328 = vld [vmem:[%s13 + $0x114] sm:$0xf]
        %v1329 = vld [vmem:[%s13 + $0x118] sm:$0xff]
        %v1330 = vld [vmem:[%s13 + $0x120] sm:$0xff]
        %v1331 = vld [vmem:[%s13 + $0x128] sm:$0xff]
        %v1332 = vld [vmem:[%s13 + $0x130] sm:$0xf]
        %v1333 = vld [vmem:[%s13 + $0x134] sm:$0xff]
        %v1334 = vld [vmem:[%s13 + $0x13c] sm:$0xff]
        %v1335 = vld [vmem:[%s13 + $0x144] sm:$0xff]
        %v1336 = vld [vmem:[%s13 + $0x14c] sm:$0xf]
        %v1337 = vld [vmem:[%s13 + $0x150] sm:$0xff]
        %v1338 = vld [vmem:[%s13 + $0x158] sm:$0xff]
        %v1339 = vld [vmem:[%s13 + $0x160] sm:$0xff]
        %v1340 = vld [vmem:[%s13 + $0x168] sm:$0xf]
        %v1341 = vld [vmem:[%s13 + $0x16c] sm:$0xff]
        %v1342 = vld [vmem:[%s13 + $0x174] sm:$0xff]
        %v1343 = vld [vmem:[%s13 + $0x17c] sm:$0xff]
        %v1344 = vld [vmem:[%s13 + $0x184] sm:$0xf]
        %v1345 = vld [vmem:[%s13 + $0x188] sm:$0xff]
        %v1346 = vld [vmem:[%s13 + $0x190] sm:$0xff]
        %v1347 = vld [vmem:[%s13 + $0x198] sm:$0xff]
        %v1348 = vld [vmem:[%s13 + $0x1a0] sm:$0xf]
        %v1349 = vld [vmem:[%s13 + $0x1a4] sm:$0xff]
        %v1350 = vld [vmem:[%s13 + $0x1ac] sm:$0xff]
        %v1351 = vld [vmem:[%s13 + $0x1b4] sm:$0xff]
        %v1352 = vld [vmem:[%s13 + $0x1bc] sm:$0xf]
        %v1353 = vld [vmem:[%s14] sm:$0x7f]
        %v1354 = vpack.c.bf16 %v1288, %v1287
        %v1356 = vperm.slane %v1353, 0
        %v1357 = vperm.slane %v1353, 1
        %v1358 = vperm.slane %v1353, 2
        %v1359 = vperm.slane %v1353, 3
        %v1360 = vperm.slane %v1353, 4
        %v1361 = vperm.slane %v1353, 5
        %v1362 = vperm.slane %v1353, 6
        %v1434 = vunpack.c.l.b16 %v1289
        %v1435 = vunpack.c.h.b16 %v1289
        %v1436 = vunpack.c.l.b16 %v1290
        %v1437 = vunpack.c.h.b16 %v1290
        %v1438 = vunpack.c.l.b16 %v1291
        %v1439 = vunpack.c.h.b16 %v1291
        %v1440 = vunpack.c.l.b16 %v1292
        %v1441 = vunpack.c.l.b16 %v1293
        %v1442 = vunpack.c.h.b16 %v1293
        %v1443 = vunpack.c.l.b16 %v1294
        %v1444 = vunpack.c.h.b16 %v1294
        %v1445 = vunpack.c.l.b16 %v1295
        %v1446 = vunpack.c.h.b16 %v1295
        %v1447 = vunpack.c.l.b16 %v1296
        %v1448 = vunpack.c.l.b16 %v1297
        %v1449 = vunpack.c.h.b16 %v1297
        %v1450 = vunpack.c.l.b16 %v1298
        %v1451 = vunpack.c.h.b16 %v1298
        %v1452 = vunpack.c.l.b16 %v1299
        %v1453 = vunpack.c.h.b16 %v1299
        %v1454 = vunpack.c.l.b16 %v1300
        %v1455 = vunpack.c.l.b16 %v1301
        %v1456 = vunpack.c.h.b16 %v1301
        %v1457 = vunpack.c.l.b16 %v1302
        %v1458 = vunpack.c.h.b16 %v1302
        %v1459 = vunpack.c.l.b16 %v1303
        %v1460 = vunpack.c.h.b16 %v1303
        %v1461 = vunpack.c.l.b16 %v1304
        %v1462 = vunpack.c.l.b16 %v1305
        %v1463 = vunpack.c.h.b16 %v1305
        %v1464 = vunpack.c.l.b16 %v1306
        %v1465 = vunpack.c.h.b16 %v1306
        %v1466 = vunpack.c.l.b16 %v1307
        %v1467 = vunpack.c.h.b16 %v1307
        %v1468 = vunpack.c.l.b16 %v1308
        %v1469 = vunpack.c.l.b16 %v1309
        %v1470 = vunpack.c.h.b16 %v1309
        %v1471 = vunpack.c.l.b16 %v1310
        %v1472 = vunpack.c.h.b16 %v1310
        %v1473 = vunpack.c.l.b16 %v1311
        %v1474 = vunpack.c.h.b16 %v1311
        %v1475 = vunpack.c.l.b16 %v1312
        %v1476 = vunpack.c.l.b16 %v1313
        %v1477 = vunpack.c.h.b16 %v1313
        %v1478 = vunpack.c.l.b16 %v1314
        %v1479 = vunpack.c.h.b16 %v1314
        %v1480 = vunpack.c.l.b16 %v1315
        %v1481 = vunpack.c.h.b16 %v1315
        %v1482 = vunpack.c.l.b16 %v1316
        %v1483 = vunpack.c.l.b16 %v1317
        %v1484 = vunpack.c.h.b16 %v1317
        %v1485 = vunpack.c.l.b16 %v1318
        %v1486 = vunpack.c.h.b16 %v1318
        %v1487 = vunpack.c.l.b16 %v1319
        %v1488 = vunpack.c.h.b16 %v1319
        %v1489 = vunpack.c.l.b16 %v1320
        %v1490 = vunpack.c.l.b16 %v1321
        %v1491 = vunpack.c.h.b16 %v1321
        %v1492 = vunpack.c.l.b16 %v1322
        %v1493 = vunpack.c.h.b16 %v1322
        %v1494 = vunpack.c.l.b16 %v1323
        %v1495 = vunpack.c.h.b16 %v1323
        %v1496 = vunpack.c.l.b16 %v1324
        %v1497 = vunpack.c.l.b16 %v1325
        %v1498 = vunpack.c.h.b16 %v1325
        %v1499 = vunpack.c.l.b16 %v1326
        %v1500 = vunpack.c.h.b16 %v1326
        %v1501 = vunpack.c.l.b16 %v1327
        %v1502 = vunpack.c.h.b16 %v1327
        %v1503 = vunpack.c.l.b16 %v1328
        %v1504 = vunpack.c.l.b16 %v1329
        %v1505 = vunpack.c.h.b16 %v1329
        %v1506 = vunpack.c.l.b16 %v1330
        %v1507 = vunpack.c.h.b16 %v1330
        %v1508 = vunpack.c.l.b16 %v1331
        %v1509 = vunpack.c.h.b16 %v1331
        %v1510 = vunpack.c.l.b16 %v1332
        %v1511 = vunpack.c.l.b16 %v1333
        %v1512 = vunpack.c.h.b16 %v1333
        %v1513 = vunpack.c.l.b16 %v1334
        %v1514 = vunpack.c.h.b16 %v1334
        %v1515 = vunpack.c.l.b16 %v1335
        %v1516 = vunpack.c.h.b16 %v1335
        %v1517 = vunpack.c.l.b16 %v1336
        %v1518 = vunpack.c.l.b16 %v1337
        %v1519 = vunpack.c.h.b16 %v1337
        %v1520 = vunpack.c.l.b16 %v1338
        %v1521 = vunpack.c.h.b16 %v1338
        %v1522 = vunpack.c.l.b16 %v1339
        %v1523 = vunpack.c.h.b16 %v1339
        %v1524 = vunpack.c.l.b16 %v1340
        %v1525 = vunpack.c.l.b16 %v1341
        %v1526 = vunpack.c.h.b16 %v1341
        %v1527 = vunpack.c.l.b16 %v1342
        %v1528 = vunpack.c.h.b16 %v1342
        %v1529 = vunpack.c.l.b16 %v1343
        %v1530 = vunpack.c.h.b16 %v1343
        %v1531 = vunpack.c.l.b16 %v1344
        %v1532 = vunpack.c.l.b16 %v1345
        %v1533 = vunpack.c.h.b16 %v1345
        %v1534 = vunpack.c.l.b16 %v1346
        %v1535 = vunpack.c.h.b16 %v1346
        %v1536 = vunpack.c.l.b16 %v1347
        %v1537 = vunpack.c.h.b16 %v1347
        %v1538 = vunpack.c.l.b16 %v1348
        %v1539 = vunpack.c.l.b16 %v1349
        %v1540 = vunpack.c.h.b16 %v1349
        %v1541 = vunpack.c.l.b16 %v1350
        %v1542 = vunpack.c.h.b16 %v1350
        %v1543 = vunpack.c.l.b16 %v1351
        %v1544 = vunpack.c.h.b16 %v1351
        %v1545 = vunpack.c.l.b16 %v1352
        %v1546 = vpack.c.b16 %v1441, %v1434
        %v1547 = vpack.c.b16 %v1442, %v1435
        %v1548 = vpack.c.b16 %v1443, %v1436
        %v1549 = vpack.c.b16 %v1444, %v1437
        %v1550 = vpack.c.b16 %v1445, %v1438
        %v1551 = vpack.c.b16 %v1446, %v1439
        %v1552 = vpack.c.b16 %v1447, %v1440
        %v1553 = vpack.c.b16 %v1455, %v1448
        %v1554 = vpack.c.b16 %v1456, %v1449
        %v1555 = vpack.c.b16 %v1457, %v1450
        %v1556 = vpack.c.b16 %v1458, %v1451
        %v1557 = vpack.c.b16 %v1459, %v1452
        %v1558 = vpack.c.b16 %v1460, %v1453
        %v1559 = vpack.c.b16 %v1461, %v1454
        %v1560 = vpack.c.b16 %v1469, %v1462
        %v1561 = vpack.c.b16 %v1470, %v1463
        %v1562 = vpack.c.b16 %v1471, %v1464
        %v1563 = vpack.c.b16 %v1472, %v1465
        %v1564 = vpack.c.b16 %v1473, %v1466
        %v1565 = vpack.c.b16 %v1474, %v1467
        %v1566 = vpack.c.b16 %v1475, %v1468
        %v1567 = vpack.c.b16 %v1483, %v1476
        %v1568 = vpack.c.b16 %v1484, %v1477
        %v1569 = vpack.c.b16 %v1485, %v1478
        %v1570 = vpack.c.b16 %v1486, %v1479
        %v1571 = vpack.c.b16 %v1487, %v1480
        %v1572 = vpack.c.b16 %v1488, %v1481
        %v1573 = vpack.c.b16 %v1489, %v1482
        %v1574 = vpack.c.b16 %v1497, %v1490
        %v1575 = vpack.c.b16 %v1498, %v1491
        %v1576 = vpack.c.b16 %v1499, %v1492
        %v1577 = vpack.c.b16 %v1500, %v1493
        %v1578 = vpack.c.b16 %v1501, %v1494
        %v1579 = vpack.c.b16 %v1502, %v1495
        %v1580 = vpack.c.b16 %v1503, %v1496
        %v1581 = vpack.c.b16 %v1511, %v1504
        %v1582 = vpack.c.b16 %v1512, %v1505
        %v1583 = vpack.c.b16 %v1513, %v1506
        %v1584 = vpack.c.b16 %v1514, %v1507
        %v1585 = vpack.c.b16 %v1515, %v1508
        %v1586 = vpack.c.b16 %v1516, %v1509
        %v1587 = vpack.c.b16 %v1517, %v1510
        %v1588 = vpack.c.b16 %v1525, %v1518
        %v1589 = vpack.c.b16 %v1526, %v1519
        %v1590 = vpack.c.b16 %v1527, %v1520
        %v1591 = vpack.c.b16 %v1528, %v1521
        %v1592 = vpack.c.b16 %v1529, %v1522
        %v1593 = vpack.c.b16 %v1530, %v1523
        %v1594 = vpack.c.b16 %v1531, %v1524
        %v1595 = vpack.c.b16 %v1539, %v1532
        %v1596 = vpack.c.b16 %v1540, %v1533
        %v1597 = vpack.c.b16 %v1541, %v1534
        %v1598 = vpack.c.b16 %v1542, %v1535
        %v1599 = vpack.c.b16 %v1543, %v1536
        %v1600 = vpack.c.b16 %v1544, %v1537
        %v1601 = vpack.c.b16 %v1545, %v1538
        %1658 = vmatpush.bf16.msra.mxu0 %v1595
        %1659 = vmatpush.bf16.msra.mxu0 %v1588
        %1660 = vmatpush.bf16.msra.mxu0 %v1581
        %1661 = vmatpush.bf16.msra.mxu0 %v1574
        %1662 = vmatpush.bf16.msra.mxu0 %v1567
        %1663 = vmatpush.bf16.msra.mxu0 %v1560
        %1664 = vmatpush.bf16.msra.mxu0 %v1553
        %1665 = vmatpush.bf16.msra.mxu0 %v1546
        %1666 = vmatmul.bf16.gmra.mxu0 %v1354
        %v1667 = vpop.f32.mrf.mxu0
        %v1668 = vadd.f32 %v1356, %v1667
        %v1669 = vpop.f32.mrf.mxu0
        %v1670 = vadd.f32 %v1356, %v1669
        %1671 = vdwg.mxu0
        %1672 = vmatpush.bf16.msra.mxu0 %v1596
        %1673 = vmatpush.bf16.msra.mxu0 %v1589
        %1674 = vmatpush.bf16.msra.mxu0 %v1582
        %1675 = vmatpush.bf16.msra.mxu0 %v1575
        %1676 = vmatpush.bf16.msra.mxu0 %v1568
        %1677 = vmatpush.bf16.msra.mxu0 %v1561
        %1678 = vmatpush.bf16.msra.mxu0 %v1554
        %1679 = vmatpush.bf16.msra.mxu0 %v1547
        %1680 = vmatmul.bf16.gmra.mxu0 %v1354
        %v1681 = vpop.f32.mrf.mxu0
        %v1682 = vadd.f32 %v1357, %v1681
        %v1683 = vpop.f32.mrf.mxu0
        %v1684 = vadd.f32 %v1357, %v1683
        %1685 = vdwg.mxu0
        %1686 = vmatpush.bf16.msra.mxu0 %v1597
        %1687 = vmatpush.bf16.msra.mxu0 %v1590
        %1688 = vmatpush.bf16.msra.mxu0 %v1583
        %1689 = vmatpush.bf16.msra.mxu0 %v1576
        %1690 = vmatpush.bf16.msra.mxu0 %v1569
        %1691 = vmatpush.bf16.msra.mxu0 %v1562
        %1692 = vmatpush.bf16.msra.mxu0 %v1555
        %1693 = vmatpush.bf16.msra.mxu0 %v1548
        %1694 = vmatmul.bf16.gmra.mxu0 %v1354
        %v1695 = vpop.f32.mrf.mxu0
        %v1696 = vadd.f32 %v1358, %v1695
        %v1697 = vpop.f32.mrf.mxu0
        %v1698 = vadd.f32 %v1358, %v1697
        %1699 = vdwg.mxu0
        %1700 = vmatpush.bf16.msra.mxu0 %v1598
        %1701 = vmatpush.bf16.msra.mxu0 %v1591
        %1702 = vmatpush.bf16.msra.mxu0 %v1584
        %1703 = vmatpush.bf16.msra.mxu0 %v1577
        %1704 = vmatpush.bf16.msra.mxu0 %v1570
        %1705 = vmatpush.bf16.msra.mxu0 %v1563
        %1706 = vmatpush.bf16.msra.mxu0 %v1556
        %1707 = vmatpush.bf16.msra.mxu0 %v1549
        %1708 = vmatmul.bf16.gmra.mxu0 %v1354
        %v1709 = vpop.f32.mrf.mxu0
        %v1710 = vadd.f32 %v1359, %v1709
        %v1711 = vpop.f32.mrf.mxu0
        %v1712 = vadd.f32 %v1359, %v1711
        %1713 = vdwg.mxu0
        %1714 = vmatpush.bf16.msra.mxu0 %v1599
        %1715 = vmatpush.bf16.msra.mxu0 %v1592
        %1716 = vmatpush.bf16.msra.mxu0 %v1585
        %1717 = vmatpush.bf16.msra.mxu0 %v1578
        %1718 = vmatpush.bf16.msra.mxu0 %v1571
        %1719 = vmatpush.bf16.msra.mxu0 %v1564
        %1720 = vmatpush.bf16.msra.mxu0 %v1557
        %1721 = vmatpush.bf16.msra.mxu0 %v1550
        %1722 = vmatmul.bf16.gmra.mxu0 %v1354
        %v1723 = vpop.f32.mrf.mxu0
        %v1724 = vadd.f32 %v1360, %v1723
        %v1725 = vpop.f32.mrf.mxu0
        %v1726 = vadd.f32 %v1360, %v1725
        %1727 = vdwg.mxu0
        %1728 = vmatpush.bf16.msra.mxu0 %v1600
        %1729 = vmatpush.bf16.msra.mxu0 %v1593
        %1730 = vmatpush.bf16.msra.mxu0 %v1586
        %1731 = vmatpush.bf16.msra.mxu0 %v1579
        %1732 = vmatpush.bf16.msra.mxu0 %v1572
        %1733 = vmatpush.bf16.msra.mxu0 %v1565
        %1734 = vmatpush.bf16.msra.mxu0 %v1558
        %1735 = vmatpush.bf16.msra.mxu0 %v1551
        %1736 = vmatmul.bf16.gmra.mxu0 %v1354
        %v1737 = vpop.f32.mrf.mxu0
        %v1738 = vadd.f32 %v1361, %v1737
        %v1739 = vpop.f32.mrf.mxu0
        %v1740 = vadd.f32 %v1361, %v1739
        %1741 = vdwg.mxu0
        %1742 = vmatpush.bf16.msra.mxu0 %v1601
        %1743 = vmatpush.bf16.msra.mxu0 %v1594
        %1744 = vmatpush.bf16.msra.mxu0 %v1587
        %1745 = vmatpush.bf16.msra.mxu0 %v1580
        %1746 = vmatpush.bf16.msra.mxu0 %v1573
        %1747 = vmatpush.bf16.msra.mxu0 %v1566
        %1748 = vmatpush.bf16.msra.mxu0 %v1559
        %1749 = vmatpush.bf16.msra.mxu0 %v1552
        %1750 = vmatmul.bf16.gmra.mxu0 %v1354
        %v1751 = vpop.f32.mrf.mxu0
        %v1752 = vadd.f32 %v1362, %v1751
        %v1753 = vpop.f32.mrf.mxu0
        %v1754 = vadd.f32 %v1362, %v1753
        %1755 = vdwg.mxu0
        %v1756 = vsub.f32 0.0, %v1668
        %v1757 = vsub.f32 0.0, %v1682
        %v1758 = vsub.f32 0.0, %v1696
        %v1759 = vsub.f32 0.0, %v1710
        %v1760 = vsub.f32 0.0, %v1724
        %v1761 = vsub.f32 0.0, %v1738
        %v1762 = vsub.f32 0.0, %v1752
        %v1763 = vsub.f32 0.0, %v1670
        %v1764 = vsub.f32 0.0, %v1684
        %v1765 = vsub.f32 0.0, %v1698
        %v1766 = vsub.f32 0.0, %v1712
        %v1767 = vsub.f32 0.0, %v1726
        %v1768 = vsub.f32 0.0, %v1740
        %v1769 = vsub.f32 0.0, %v1754
        %v1770 = vmul.f32 %v1756, 1.442695
        %v1771 = vpow.pop %v1770
        %v1772 = vmul.f32 %v1757, 1.442695
        %v1773 = vpow.pop %v1772
        %v1774 = vmul.f32 %v1758, 1.442695
        %v1775 = vpow.pop %v1774
        %v1776 = vmul.f32 %v1759, 1.442695
        %v1777 = vpow.pop %v1776
        %v1778 = vmul.f32 %v1760, 1.442695
        %v1779 = vpow.pop %v1778
        %v1780 = vmul.f32 %v1761, 1.442695
        %v1781 = vpow.pop %v1780
        %v1782 = vmul.f32 %v1762, 1.442695
        %v1783 = vpow.pop %v1782
        %v1784 = vmul.f32 %v1763, 1.442695
        %v1785 = vpow.pop %v1784
        %v1786 = vmul.f32 %v1764, 1.442695
        %v1787 = vpow.pop %v1786
        %v1788 = vmul.f32 %v1765, 1.442695
        %v1789 = vpow.pop %v1788
        %v1790 = vmul.f32 %v1766, 1.442695
        %v1791 = vpow.pop %v1790
        %v1792 = vmul.f32 %v1767, 1.442695
        %v1793 = vpow.pop %v1792
        %v1794 = vmul.f32 %v1768, 1.442695
        %v1795 = vpow.pop %v1794
        %v1796 = vmul.f32 %v1769, 1.442695
        %v1797 = vpow.pop %v1796
        %v1798 = vadd.f32 %v1771, 1.0
        %v1799 = vadd.f32 %v1773, 1.0
        %v1800 = vadd.f32 %v1775, 1.0
        %v1801 = vadd.f32 %v1777, 1.0
        %v1802 = vadd.f32 %v1779, 1.0
        %v1803 = vadd.f32 %v1781, 1.0
        %v1804 = vadd.f32 %v1783, 1.0
        %v1805 = vadd.f32 %v1785, 1.0
        %v1806 = vadd.f32 %v1787, 1.0
        %v1807 = vadd.f32 %v1789, 1.0
        %v1808 = vadd.f32 %v1791, 1.0
        %v1809 = vadd.f32 %v1793, 1.0
        %v1810 = vadd.f32 %v1795, 1.0
        %v1811 = vadd.f32 %v1797, 1.0
        %v1812 = vrcp.pop %v1798
        %v1813 = vrcp.pop %v1799
        %v1814 = vrcp.pop %v1800
        %v1815 = vrcp.pop %v1801
        %v1816 = vrcp.pop %v1802
        %v1817 = vrcp.pop %v1803
        %v1818 = vrcp.pop %v1804
        %v1819 = vrcp.pop %v1805
        %v1820 = vrcp.pop %v1806
        %v1821 = vrcp.pop %v1807
        %v1822 = vrcp.pop %v1808
        %v1823 = vrcp.pop %v1809
        %v1824 = vrcp.pop %v1810
        %v1825 = vrcp.pop %v1811
        %1826 = vst [vmem:[%s490] sm:$0xff] %v1812
        %1827 = vst [vmem:[%s490 + $0x8] sm:$0xff] %v1813
        %1828 = vst [vmem:[%s490 + $0x10] sm:$0xff] %v1814
        %1829 = vst [vmem:[%s490 + $0x18] sm:$0xff] %v1815
        %1830 = vst [vmem:[%s490 + $0x20] sm:$0xff] %v1816
        %1831 = vst [vmem:[%s490 + $0x28] sm:$0xff] %v1817
        %1832 = vst.msk [vmem:[%s490 + $0x30] sm:$0xff] %vm917, %v1818
        %1833 = vst [vmem:[%s490 + $0x38] sm:$0xff] %v1819
        %1834 = vst [vmem:[%s490 + $0x40] sm:$0xff] %v1820
        %1835 = vst [vmem:[%s490 + $0x48] sm:$0xff] %v1821
        %1836 = vst [vmem:[%s490 + $0x50] sm:$0xff] %v1822
        %1837 = vst [vmem:[%s490 + $0x58] sm:$0xff] %v1823
        %1838 = vst [vmem:[%s490 + $0x60] sm:$0xff] %v1824
        %1839 = vst.msk [vmem:[%s490 + $0x68] sm:$0xff] %vm917, %v1825
        %s1840 = sand.u32 %s357, 1
        %s1841 = scalar_lea.sflag [#allocation3], %s1840
        %s1842 = sand.u32 %s357, 1
        %s1843 = smul.addr %s1842, 112
        %s1844 = scalar_lea.vmem [#allocation2], %s1843
        // Predicated region
        $region81: #{tpu_custom_call.1} parent=79 // pred_check
          %p1845 = pneg %p367
        $region82: #{tpu_custom_call.1} parent=79 // pred_check_branch
          %1847 = sbr.rel (%p1845) target = $region84
        $region83: #{tpu_custom_call.1} parent=79 // pred_region
          %s1848 = smul.u32 2, %s29
          %1850 = vsyncadd %s1841, 0
          %s1851 = smul.addr %s1848, 7
          %s1852 = smul.addr %s1851, 8
          %s1853 = scalar_lea.hbm %s15, %s1852
          %s1854 = sshll.u32 %s1844, 4
          %s1855 = int_to_ptr.vmem [resolvable:$true] %s1854
          %s1856 = sshll.u32 %s1853, 4
          %s1857 = int_to_ptr.hbm [resolvable:$true] %s1856
          %1862 = dma.vmem_to_hbm [thread:$0]  %s1855, 1792, %s1857, %s1841, 896, 896, 56
        $region84: #{tpu_custom_call.1} parent=79 // pred_fallthru
          _
      $region80: #{tpu_custom_call.1} parent=5 // pred_fallthru
        _
      %p1863 = scmp.le.s32.totalorder 2, %s24
      // Predicated region
      $region85: #{tpu_custom_call.1} parent=5 // pred_check
        %p1864 = pneg %p1863
      $region86: #{tpu_custom_call.1} parent=5 // pred_check_branch
        %1866 = sbr.rel (%p1864) target = $region88
      $region87: #{tpu_custom_call.1} parent=5 // pred_region
        %s1867 = ssub.s32 %s24, 2
        // Predicated region
        $region89: #{tpu_custom_call.1} parent=87 // pred_check
          %p1868 = pneg %p373
        $region90: #{tpu_custom_call.1} parent=87 // pred_check_branch
          %1870 = sbr.rel (%p1868) target = $region92
        $region91: #{tpu_custom_call.1} parent=87 // pred_region
          %s1871 = sand.u32 %s358, 1
          %s1872 = scalar_lea.sflag [#allocation3], %s1871
          %s1873 = sand.u32 %s358, 1
          %s1874 = smul.addr %s1873, 112
          %s1875 = scalar_lea.vmem [#allocation2], %s1874
          %1877 = dma.done %s1872, 1792
        $region92: #{tpu_custom_call.1} parent=87 // pred_fallthru
          _
      $region88: #{tpu_custom_call.1} parent=5 // pred_fallthru
        _
    $region6: #{tpu_custom_call.1} parent=1 // loop_footer
      %s28 = sadd.s32 1, %s24
    $region7: #{tpu_custom_call.1} parent=1 // loop_footer_branch
      %23 = sbr.rel target = $region3
    $region8: #{tpu_custom_call.1} parent=1 // loop_exit
      _
    %1878 = vsyncpa [#allocation3], 1
    %s1879 = scalar_lea.sflag [#allocation3], 1
    %1880 = vsyncpa %s1879, 1

</llo_original>
